<compile_context>
chip_gen: v6e
topology: v6e:2x2x1
jax: 0.10.0
libtpu: 0.0.40
codegen_flags: <defaults>
</compile_context>

<pallas_src>
import math
import jax
import jax.numpy as jnp
from jax.experimental import pallas as pl
from jax.experimental.pallas import tpu as pltpu

# ---- "__C" config (small, deterministic) ----
HIDDEN_SIZE = 32
MULTI_HEAD = 4
HIDDEN_SIZE_HEAD = HIDDEN_SIZE // MULTI_HEAD
DROPOUT_R = 0.1  # nn.Dropout is identity at inference


def _mhatt_kernel(q_ref, k_ref, v_ref, mask_ref,
                  wq_ref, bq_ref, wk_ref, bk_ref, wv_ref, bv_ref,
                  wm_ref, bm_ref, out_ref):
    """Bt batch elements per grid step: projections + per-head attention + fused merge."""
    H, Dh = MULTI_HEAD, HIDDEN_SIZE_HEAD
    scale = 1.0 / math.sqrt(Dh)
    Bt, S, D = q_ref.shape
    bf16 = jnp.bfloat16

    # (Bt, S, D) -> (Bt*S, D): large-M projection matmuls.  f32 reshape with
    # S == 8 rows per batch element (one f32 sublane tile) -> layout no-op.
    q2 = q_ref[...].reshape(Bt * S, D)
    k2 = k_ref[...].reshape(Bt * S, D)
    v2 = v_ref[...].reshape(Bt * S, D)

    def mm(a, b):  # bf16 operands (MXU-native), f32 accumulation
        return jnp.dot(a.astype(bf16), b.astype(bf16),
                       preferred_element_type=jnp.float32)

    qp = (mm(q2, wq_ref[...]) + bq_ref[...]).reshape(Bt, S, D)
    kp = (mm(k2, wk_ref[...]) + bk_ref[...]).reshape(Bt, S, D)
    vp = (mm(v2, wv_ref[...]) + bv_ref[...]).reshape(Bt, S, D)

    # Hoisted out of the head loop: bf16 copies of the projections, merge
    # weight, and the mask comparison.
    qpb = qp.astype(bf16)
    kpb = kp.astype(bf16)
    vpb = vp.astype(bf16)
    wmb = wm_ref[...].astype(bf16)
    is_masked = mask_ref[...] > 0.5          # (Bt, 1, S)

    merged = jnp.zeros((Bt * S, D), jnp.float32)
    for h in range(H):                        # static unroll over heads (H = 4)
        sl = slice(h * Dh, (h + 1) * Dh)
        qh, kh, vh = qpb[:, :, sl], kpb[:, :, sl], vpb[:, :, sl]   # (Bt, S, Dh)

        s = jnp.einsum('bqd,bkd->bqk', qh, kh,
                       preferred_element_type=jnp.float32) * scale  # (Bt, S, S)
        # Exact TRAR semantics: exp(shift) FIRST, then masked_fill, then softmax.
        s = jnp.exp(s - jnp.max(s, axis=-1, keepdims=True))
        s = jnp.where(is_masked, jnp.float32(-1e9), s)
        e = jnp.exp(s - jnp.max(s, axis=-1, keepdims=True))
        att = e / jnp.sum(e, axis=-1, keepdims=True)
        # TODO(synk): dropout on the attention map is identity here (inference mode).

        head_out = jnp.einsum('bqk,bkd->bqd', att.astype(bf16), vh,
                              preferred_element_type=jnp.float32)   # (Bt, S, Dh)
        # linear_merge folded into the head loop: accumulate head_out @ Wm[rows h].
        merged = merged + mm(head_out.reshape(Bt * S, Dh), wmb[sl, :])

    merged = merged + bm_ref[...]             # (1, D) broadcasts over all rows
    out_ref[...] = merged.reshape(Bt, S, D).astype(out_ref.dtype)


def indirect_mhatt(v, k, q, mask, params, block_b=16):
    """v, k, q: (B, S, D) float32. mask: (B, S) bool (True = masked key position)."""
    B, S, D = q.shape
    wq, bq, wk, bk, wv, bv, wm, bm = params
    mask_f = mask.astype(jnp.float32).reshape(B, 1, S)

    Bt = min(block_b, B)
    nb = pl.cdiv(B, Bt)
    Bp = nb * Bt
    if Bp != B:  # pad batch to a multiple of the tile; padded rows are sliced off
        padb = Bp - B
        q = jnp.pad(q, ((0, padb), (0, 0), (0, 0)))
        k = jnp.pad(k, ((0, padb), (0, 0), (0, 0)))
        v = jnp.pad(v, ((0, padb), (0, 0), (0, 0)))
        mask_f = jnp.pad(mask_f, ((0, padb), (0, 0), (0, 0)))

    bsd_spec = pl.BlockSpec((Bt, S, D), lambda b: (b, 0, 0))
    w_spec = pl.BlockSpec((D, D), lambda b: (0, 0))
    b_spec = pl.BlockSpec((1, D), lambda b: (0, 0))

    out = pl.pallas_call(
        _mhatt_kernel,
        out_shape=jax.ShapeDtypeStruct((Bp, S, D), q.dtype),
        grid_spec=pl.GridSpec(
            grid=(nb,),
            in_specs=[
                bsd_spec,                                       # q
                bsd_spec,                                       # k
                bsd_spec,                                       # v
                pl.BlockSpec((Bt, 1, S), lambda b: (b, 0, 0)),  # mask
                w_spec, b_spec,                                 # Wq, bq
                w_spec, b_spec,                                 # Wk, bk
                w_spec, b_spec,                                 # Wv, bv
                w_spec, b_spec,                                 # Wm, bm
            ],
            out_specs=bsd_spec,
        ),
        compiler_params=pltpu.CompilerParams(
            dimension_semantics=("parallel",)),   # batch-parallel: 2 TCs on v7x
    )(q, k, v, mask_f, wq, bq, wk, bk, wv, bv, wm, bm)
    return out[:B]


def init_params(key, d):
    """Deterministic xavier-uniform weights (stored transposed: (in, out)) + linear-default biases."""
    keys = jax.random.split(key, 8)
    bound_w = math.sqrt(6.0 / (d + d))
    bound_b = 1.0 / math.sqrt(d)
    params = []
    for i in range(4):
        w = jax.random.uniform(keys[2 * i], (d, d), jnp.float32, -bound_w, bound_w)
        b = jax.random.uniform(keys[2 * i + 1], (1, d), jnp.float32, -bound_b, bound_b)
        params += [w, b]
    return tuple(params)  # wq, bq, wk, bk, wv, bv, wm, bm


def reference(v, k, q, mask, params):
    """Pure-JAX replica of the PyTorch forward, mirroring the kernel's mixed-precision
    regime (bf16 matmul operands, f32 accumulation) so the check is independent of
    the backend's default matmul precision."""
    wq, bq, wk, bk, wv, bv, wm, bm = params
    B, S, D = q.shape
    H, Dh = MULTI_HEAD, HIDDEN_SIZE_HEAD
    scale = 1.0 / math.sqrt(Dh)
    bf16 = jnp.bfloat16

    def mm(a, b):
        return jnp.dot(a.astype(bf16), b.astype(bf16),
                       preferred_element_type=jnp.float32)

    def proj(x, w, b):
        y = mm(x.reshape(B * S, D), w) + b
        return y.reshape(B, S, H, Dh).transpose(0, 2, 1, 3)      # (B, H, S, Dh)

    qp, kp, vp = proj(q, wq, bq), proj(k, wk, bk), proj(v, wv, bv)
    s = jnp.einsum('bhqd,bhkd->bhqk', qp.astype(bf16), kp.astype(bf16),
                   preferred_element_type=jnp.float32) * scale
    s = jnp.exp(s - jnp.max(s, axis=-1, keepdims=True))
    s = jnp.where(mask.reshape(B, 1, 1, S), jnp.float32(-1e9), s)
    e = jnp.exp(s - jnp.max(s, axis=-1, keepdims=True))
    att = e / jnp.sum(e, axis=-1, keepdims=True)
    out = jnp.einsum('bhqk,bhkd->bhqd', att.astype(bf16), vp.astype(bf16),
                     preferred_element_type=jnp.float32)
    out = out.transpose(0, 2, 1, 3).reshape(B, S, D)
    return mm(out, wm) + bm


if __name__ == "__main__":
    B, S, D = 2, 8, HIDDEN_SIZE
    key = jax.random.PRNGKey(0)
    kq, kk, kv, kp = jax.random.split(key, 4)
    q = jax.random.normal(kq, (B, S, D), jnp.float32)
    k = jax.random.normal(kk, (B, S, D), jnp.float32)
    v = jax.random.normal(kv, (B, S, D), jnp.float32)
    # mask: last two key positions of batch 1 are padded (True = masked)
    mask = jnp.zeros((B, S), jnp.bool_).at[1, -2:].set(True)
    params = init_params(kp, D)

    out = indirect_mhatt(v, k, q, mask, params)
    out = jax.block_until_ready(out)

    ref = reference(v, k, q, mask, params)
    assert out.shape == (B, S, D)
    # Kernel and reference share the same bf16-operand / f32-accumulate matmul
    # regime, so the only residual differences are accumulation order and the
    # backend exp implementation (well below 1e-2).
    err = float(jnp.max(jnp.abs(out - ref)))
    assert jnp.allclose(out, ref, rtol=1e-2, atol=1e-2), f"kernel mismatch vs reference (max |diff| = {err})"
    print("KERNEL_OK")
</pallas_src>

<mosaic_0001>
module attributes {stable_mosaic.version = 11 : i64} {
  func.func @_mhatt_kernel(%arg0: i32, %arg1: memref<2x8x32xf32, #tpu.memory_space<vmem>>, %arg2: memref<2x8x32xf32, #tpu.memory_space<vmem>>, %arg3: memref<2x8x32xf32, #tpu.memory_space<vmem>>, %arg4: memref<2x1x8xf32, #tpu.memory_space<vmem>>, %arg5: memref<32x32xf32, #tpu.memory_space<vmem>>, %arg6: memref<1x32xf32, #tpu.memory_space<vmem>>, %arg7: memref<32x32xf32, #tpu.memory_space<vmem>>, %arg8: memref<1x32xf32, #tpu.memory_space<vmem>>, %arg9: memref<32x32xf32, #tpu.memory_space<vmem>>, %arg10: memref<1x32xf32, #tpu.memory_space<vmem>>, %arg11: memref<32x32xf32, #tpu.memory_space<vmem>>, %arg12: memref<1x32xf32, #tpu.memory_space<vmem>>, %arg13: memref<2x8x32xf32, #tpu.memory_space<vmem>>) attributes {dimension_semantics = [#tpu.dimension_semantics<parallel>], iteration_bounds = array<i64: 1>, scalar_prefetch = 0 : i64, scratch_operands = 0 : i64, tpu.core_type = #tpu.core_type<tc>, window_params = [{transform_indices = @transform_0, window_bounds = array<i64: 2, 8, 32>}, {transform_indices = @transform_1, window_bounds = array<i64: 2, 8, 32>}, {transform_indices = @transform_2, window_bounds = array<i64: 2, 8, 32>}, {transform_indices = @transform_3, window_bounds = array<i64: 2, 1, 8>}, {pipeline_mode = #tpu.pipeline_mode<synchronous>, transform_indices = @transform_4, window_bounds = array<i64: 32, 32>}, {pipeline_mode = #tpu.pipeline_mode<synchronous>, transform_indices = @transform_5, window_bounds = array<i64: 1, 32>}, {pipeline_mode = #tpu.pipeline_mode<synchronous>, transform_indices = @transform_6, window_bounds = array<i64: 32, 32>}, {pipeline_mode = #tpu.pipeline_mode<synchronous>, transform_indices = @transform_7, window_bounds = array<i64: 1, 32>}, {pipeline_mode = #tpu.pipeline_mode<synchronous>, transform_indices = @transform_8, window_bounds = array<i64: 32, 32>}, {pipeline_mode = #tpu.pipeline_mode<synchronous>, transform_indices = @transform_9, window_bounds = array<i64: 1, 32>}, {pipeline_mode = #tpu.pipeline_mode<synchronous>, transform_indices = @transform_10, window_bounds = array<i64: 32, 32>}, {pipeline_mode = #tpu.pipeline_mode<synchronous>, transform_indices = @transform_11, window_bounds = array<i64: 1, 32>}, {transform_indices = @transform_12, window_bounds = array<i64: 2, 8, 32>}]} {
    %c0 = arith.constant 0 : index
    %c0_0 = arith.constant 0 : index
    %c0_1 = arith.constant 0 : index
    %0 = vector.load %arg1[%c0, %c0_0, %c0_1] : memref<2x8x32xf32, #tpu.memory_space<vmem>>, vector<2x8x32xf32>
    %1 = vector.shape_cast %0 : vector<2x8x32xf32> to vector<16x32xf32>
    %c0_2 = arith.constant 0 : index
    %c0_3 = arith.constant 0 : index
    %c0_4 = arith.constant 0 : index
    %2 = vector.load %arg2[%c0_2, %c0_3, %c0_4] : memref<2x8x32xf32, #tpu.memory_space<vmem>>, vector<2x8x32xf32>
    %3 = vector.shape_cast %2 : vector<2x8x32xf32> to vector<16x32xf32>
    %c0_5 = arith.constant 0 : index
    %c0_6 = arith.constant 0 : index
    %c0_7 = arith.constant 0 : index
    %4 = vector.load %arg3[%c0_5, %c0_6, %c0_7] : memref<2x8x32xf32, #tpu.memory_space<vmem>>, vector<2x8x32xf32>
    %5 = vector.shape_cast %4 : vector<2x8x32xf32> to vector<16x32xf32>
    %c0_8 = arith.constant 0 : index
    %c0_9 = arith.constant 0 : index
    %6 = vector.load %arg5[%c0_8, %c0_9] : memref<32x32xf32, #tpu.memory_space<vmem>>, vector<32x32xf32>
    %7 = arith.truncf %1 : vector<16x32xf32> to vector<16x32xbf16>
    %8 = arith.truncf %6 : vector<32x32xf32> to vector<32x32xbf16>
    %cst = arith.constant dense<0.000000e+00> : vector<16x32xf32>
    %9 = tpu.matmul %7, %8, %cst {dimension_numbers = #tpu.dot_dimension_numbers<[1], [0], [0], [1], [0, 0, 1, 1], [], []>} : vector<16x32xbf16>, vector<32x32xbf16>, vector<16x32xf32> -> vector<16x32xf32>
    %c0_10 = arith.constant 0 : index
    %c0_11 = arith.constant 0 : index
    %10 = vector.load %arg6[%c0_10, %c0_11] : memref<1x32xf32, #tpu.memory_space<vmem>>, vector<1x32xf32>
    %11 = vector.broadcast %10 : vector<1x32xf32> to vector<16x32xf32>
    %12 = arith.addf %9, %11 : vector<16x32xf32>
    %13 = vector.shape_cast %12 : vector<16x32xf32> to vector<2x8x32xf32>
    %c0_12 = arith.constant 0 : index
    %c0_13 = arith.constant 0 : index
    %14 = vector.load %arg7[%c0_12, %c0_13] : memref<32x32xf32, #tpu.memory_space<vmem>>, vector<32x32xf32>
    %15 = arith.truncf %3 : vector<16x32xf32> to vector<16x32xbf16>
    %16 = arith.truncf %14 : vector<32x32xf32> to vector<32x32xbf16>
    %cst_14 = arith.constant dense<0.000000e+00> : vector<16x32xf32>
    %17 = tpu.matmul %15, %16, %cst_14 {dimension_numbers = #tpu.dot_dimension_numbers<[1], [0], [0], [1], [0, 0, 1, 1], [], []>} : vector<16x32xbf16>, vector<32x32xbf16>, vector<16x32xf32> -> vector<16x32xf32>
    %c0_15 = arith.constant 0 : index
    %c0_16 = arith.constant 0 : index
    %18 = vector.load %arg8[%c0_15, %c0_16] : memref<1x32xf32, #tpu.memory_space<vmem>>, vector<1x32xf32>
    %19 = vector.broadcast %18 : vector<1x32xf32> to vector<16x32xf32>
    %20 = arith.addf %17, %19 : vector<16x32xf32>
    %21 = vector.shape_cast %20 : vector<16x32xf32> to vector<2x8x32xf32>
    %c0_17 = arith.constant 0 : index
    %c0_18 = arith.constant 0 : index
    %22 = vector.load %arg9[%c0_17, %c0_18] : memref<32x32xf32, #tpu.memory_space<vmem>>, vector<32x32xf32>
    %23 = arith.truncf %5 : vector<16x32xf32> to vector<16x32xbf16>
    %24 = arith.truncf %22 : vector<32x32xf32> to vector<32x32xbf16>
    %cst_19 = arith.constant dense<0.000000e+00> : vector<16x32xf32>
    %25 = tpu.matmul %23, %24, %cst_19 {dimension_numbers = #tpu.dot_dimension_numbers<[1], [0], [0], [1], [0, 0, 1, 1], [], []>} : vector<16x32xbf16>, vector<32x32xbf16>, vector<16x32xf32> -> vector<16x32xf32>
    %c0_20 = arith.constant 0 : index
    %c0_21 = arith.constant 0 : index
    %26 = vector.load %arg10[%c0_20, %c0_21] : memref<1x32xf32, #tpu.memory_space<vmem>>, vector<1x32xf32>
    %27 = vector.broadcast %26 : vector<1x32xf32> to vector<16x32xf32>
    %28 = arith.addf %25, %27 : vector<16x32xf32>
    %29 = vector.shape_cast %28 : vector<16x32xf32> to vector<2x8x32xf32>
    %30 = arith.truncf %13 : vector<2x8x32xf32> to vector<2x8x32xbf16>
    %31 = arith.truncf %21 : vector<2x8x32xf32> to vector<2x8x32xbf16>
    %32 = arith.truncf %29 : vector<2x8x32xf32> to vector<2x8x32xbf16>
    %c0_22 = arith.constant 0 : index
    %c0_23 = arith.constant 0 : index
    %33 = vector.load %arg11[%c0_22, %c0_23] : memref<32x32xf32, #tpu.memory_space<vmem>>, vector<32x32xf32>
    %34 = arith.truncf %33 : vector<32x32xf32> to vector<32x32xbf16>
    %c0_24 = arith.constant 0 : index
    %c0_25 = arith.constant 0 : index
    %c0_26 = arith.constant 0 : index
    %35 = vector.load %arg4[%c0_24, %c0_25, %c0_26] : memref<2x1x8xf32, #tpu.memory_space<vmem>>, vector<2x1x8xf32>
    %cst_27 = arith.constant 5.000000e-01 : f32
    %36 = vector.broadcast %cst_27 : f32 to vector<2x1x8xf32>
    %37 = arith.cmpf ogt, %35, %36 : vector<2x1x8xf32>
    %cst_28 = arith.constant 0.000000e+00 : f32
    %38 = vector.broadcast %cst_28 : f32 to vector<16x32xf32>
    %39 = vector.extract_strided_slice %30 {offsets = [0, 0, 0], sizes = [2, 8, 8], strides = [1, 1, 1]} : vector<2x8x32xbf16> to vector<2x8x8xbf16>
    %40 = vector.extract_strided_slice %31 {offsets = [0, 0, 0], sizes = [2, 8, 8], strides = [1, 1, 1]} : vector<2x8x32xbf16> to vector<2x8x8xbf16>
    %41 = vector.extract_strided_slice %32 {offsets = [0, 0, 0], sizes = [2, 8, 8], strides = [1, 1, 1]} : vector<2x8x32xbf16> to vector<2x8x8xbf16>
    "tpu.trace_start"() <{level = 10 : i32, message = "bqd,bkd->bqk"}> : () -> ()
    %cst_29 = arith.constant dense<0.000000e+00> : vector<2x8x8xf32>
    %42 = tpu.matmul %39, %40, %cst_29 {dimension_numbers = #tpu.dot_dimension_numbers<[2], [2], [1], [1], [0, 0, 0, 1, 1, 1], [0], [0]>} : vector<2x8x8xbf16>, vector<2x8x8xbf16>, vector<2x8x8xf32> -> vector<2x8x8xf32>
    "tpu.trace_stop"() : () -> ()
    %cst_30 = arith.constant 0.353553385 : f32
    %43 = vector.broadcast %cst_30 : f32 to vector<2x8x8xf32>
    %44 = arith.mulf %42, %43 : vector<2x8x8xf32>
    %cst_31 = arith.constant dense<0xFF800000> : vector<2x8xf32>
    %45 = vector.multi_reduction <maximumf>, %44, %cst_31 [2] : vector<2x8x8xf32> to vector<2x8xf32>
    %46 = vector.shape_cast %45 : vector<2x8xf32> to vector<2x8x1xf32>
    %47 = vector.broadcast %46 : vector<2x8x1xf32> to vector<2x8x8xf32>
    %48 = arith.subf %44, %47 : vector<2x8x8xf32>
    %49 = math.exp %48 : vector<2x8x8xf32>
    %cst_32 = arith.constant -1.000000e+09 : f32
    %50 = vector.shape_cast %37 : vector<2x1x8xi1> to vector<2x1x8xi1>
    %51 = vector.broadcast %50 : vector<2x1x8xi1> to vector<2x8x8xi1>
    %52 = vector.broadcast %cst_32 : f32 to vector<2x8x8xf32>
    %53 = arith.select %51, %52, %49 : vector<2x8x8xi1>, vector<2x8x8xf32>
    %cst_33 = arith.constant dense<0xFF800000> : vector<2x8xf32>
    %54 = vector.multi_reduction <maximumf>, %53, %cst_33 [2] : vector<2x8x8xf32> to vector<2x8xf32>
    %55 = vector.shape_cast %54 : vector<2x8xf32> to vector<2x8x1xf32>
    %56 = vector.broadcast %55 : vector<2x8x1xf32> to vector<2x8x8xf32>
    %57 = arith.subf %53, %56 : vector<2x8x8xf32>
    %58 = math.exp %57 : vector<2x8x8xf32>
    %cst_34 = arith.constant dense<0.000000e+00> : vector<2x8xf32>
    %59 = vector.multi_reduction <add>, %58, %cst_34 [2] : vector<2x8x8xf32> to vector<2x8xf32>
    %60 = vector.shape_cast %59 : vector<2x8xf32> to vector<2x8x1xf32>
    %61 = vector.broadcast %60 : vector<2x8x1xf32> to vector<2x8x8xf32>
    %62 = arith.divf %58, %61 : vector<2x8x8xf32>
    %63 = arith.truncf %62 : vector<2x8x8xf32> to vector<2x8x8xbf16>
    "tpu.trace_start"() <{level = 10 : i32, message = "bqk,bkd->bqd"}> : () -> ()
    %cst_35 = arith.constant dense<0.000000e+00> : vector<2x8x8xf32>
    %64 = tpu.matmul %63, %41, %cst_35 {dimension_numbers = #tpu.dot_dimension_numbers<[2], [1], [1], [2], [0, 0, 0, 1, 1, 2], [0], [0]>} : vector<2x8x8xbf16>, vector<2x8x8xbf16>, vector<2x8x8xf32> -> vector<2x8x8xf32>
    "tpu.trace_stop"() : () -> ()
    %65 = vector.shape_cast %64 : vector<2x8x8xf32> to vector<16x8xf32>
    %66 = vector.extract_strided_slice %34 {offsets = [0, 0], sizes = [8, 32], strides = [1, 1]} : vector<32x32xbf16> to vector<8x32xbf16>
    %67 = arith.truncf %65 : vector<16x8xf32> to vector<16x8xbf16>
    %cst_36 = arith.constant dense<0.000000e+00> : vector<16x32xf32>
    %68 = tpu.matmul %67, %66, %cst_36 {dimension_numbers = #tpu.dot_dimension_numbers<[1], [0], [0], [1], [0, 0, 1, 1], [], []>} : vector<16x8xbf16>, vector<8x32xbf16>, vector<16x32xf32> -> vector<16x32xf32>
    %69 = arith.addf %38, %68 : vector<16x32xf32>
    %70 = vector.extract_strided_slice %30 {offsets = [0, 0, 8], sizes = [2, 8, 8], strides = [1, 1, 1]} : vector<2x8x32xbf16> to vector<2x8x8xbf16>
    %71 = vector.extract_strided_slice %31 {offsets = [0, 0, 8], sizes = [2, 8, 8], strides = [1, 1, 1]} : vector<2x8x32xbf16> to vector<2x8x8xbf16>
    %72 = vector.extract_strided_slice %32 {offsets = [0, 0, 8], sizes = [2, 8, 8], strides = [1, 1, 1]} : vector<2x8x32xbf16> to vector<2x8x8xbf16>
    "tpu.trace_start"() <{level = 10 : i32, message = "bqd,bkd->bqk"}> : () -> ()
    %cst_37 = arith.constant dense<0.000000e+00> : vector<2x8x8xf32>
    %73 = tpu.matmul %70, %71, %cst_37 {dimension_numbers = #tpu.dot_dimension_numbers<[2], [2], [1], [1], [0, 0, 0, 1, 1, 1], [0], [0]>} : vector<2x8x8xbf16>, vector<2x8x8xbf16>, vector<2x8x8xf32> -> vector<2x8x8xf32>
    "tpu.trace_stop"() : () -> ()
    %cst_38 = arith.constant 0.353553385 : f32
    %74 = vector.broadcast %cst_38 : f32 to vector<2x8x8xf32>
    %75 = arith.mulf %73, %74 : vector<2x8x8xf32>
    %cst_39 = arith.constant dense<0xFF800000> : vector<2x8xf32>
    %76 = vector.multi_reduction <maximumf>, %75, %cst_39 [2] : vector<2x8x8xf32> to vector<2x8xf32>
    %77 = vector.shape_cast %76 : vector<2x8xf32> to vector<2x8x1xf32>
    %78 = vector.broadcast %77 : vector<2x8x1xf32> to vector<2x8x8xf32>
    %79 = arith.subf %75, %78 : vector<2x8x8xf32>
    %80 = math.exp %79 : vector<2x8x8xf32>
    %cst_40 = arith.constant -1.000000e+09 : f32
    %81 = vector.shape_cast %37 : vector<2x1x8xi1> to vector<2x1x8xi1>
    %82 = vector.broadcast %81 : vector<2x1x8xi1> to vector<2x8x8xi1>
    %83 = vector.broadcast %cst_40 : f32 to vector<2x8x8xf32>
    %84 = arith.select %82, %83, %80 : vector<2x8x8xi1>, vector<2x8x8xf32>
    %cst_41 = arith.constant dense<0xFF800000> : vector<2x8xf32>
    %85 = vector.multi_reduction <maximumf>, %84, %cst_41 [2] : vector<2x8x8xf32> to vector<2x8xf32>
    %86 = vector.shape_cast %85 : vector<2x8xf32> to vector<2x8x1xf32>
    %87 = vector.broadcast %86 : vector<2x8x1xf32> to vector<2x8x8xf32>
    %88 = arith.subf %84, %87 : vector<2x8x8xf32>
    %89 = math.exp %88 : vector<2x8x8xf32>
    %cst_42 = arith.constant dense<0.000000e+00> : vector<2x8xf32>
    %90 = vector.multi_reduction <add>, %89, %cst_42 [2] : vector<2x8x8xf32> to vector<2x8xf32>
    %91 = vector.shape_cast %90 : vector<2x8xf32> to vector<2x8x1xf32>
    %92 = vector.broadcast %91 : vector<2x8x1xf32> to vector<2x8x8xf32>
    %93 = arith.divf %89, %92 : vector<2x8x8xf32>
    %94 = arith.truncf %93 : vector<2x8x8xf32> to vector<2x8x8xbf16>
    "tpu.trace_start"() <{level = 10 : i32, message = "bqk,bkd->bqd"}> : () -> ()
    %cst_43 = arith.constant dense<0.000000e+00> : vector<2x8x8xf32>
    %95 = tpu.matmul %94, %72, %cst_43 {dimension_numbers = #tpu.dot_dimension_numbers<[2], [1], [1], [2], [0, 0, 0, 1, 1, 2], [0], [0]>} : vector<2x8x8xbf16>, vector<2x8x8xbf16>, vector<2x8x8xf32> -> vector<2x8x8xf32>
    "tpu.trace_stop"() : () -> ()
    %96 = vector.shape_cast %95 : vector<2x8x8xf32> to vector<16x8xf32>
    %97 = vector.extract_strided_slice %34 {offsets = [8, 0], sizes = [8, 32], strides = [1, 1]} : vector<32x32xbf16> to vector<8x32xbf16>
    %98 = arith.truncf %96 : vector<16x8xf32> to vector<16x8xbf16>
    %cst_44 = arith.constant dense<0.000000e+00> : vector<16x32xf32>
    %99 = tpu.matmul %98, %97, %cst_44 {dimension_numbers = #tpu.dot_dimension_numbers<[1], [0], [0], [1], [0, 0, 1, 1], [], []>} : vector<16x8xbf16>, vector<8x32xbf16>, vector<16x32xf32> -> vector<16x32xf32>
    %100 = arith.addf %69, %99 : vector<16x32xf32>
    %101 = vector.extract_strided_slice %30 {offsets = [0, 0, 16], sizes = [2, 8, 8], strides = [1, 1, 1]} : vector<2x8x32xbf16> to vector<2x8x8xbf16>
    %102 = vector.extract_strided_slice %31 {offsets = [0, 0, 16], sizes = [2, 8, 8], strides = [1, 1, 1]} : vector<2x8x32xbf16> to vector<2x8x8xbf16>
    %103 = vector.extract_strided_slice %32 {offsets = [0, 0, 16], sizes = [2, 8, 8], strides = [1, 1, 1]} : vector<2x8x32xbf16> to vector<2x8x8xbf16>
    "tpu.trace_start"() <{level = 10 : i32, message = "bqd,bkd->bqk"}> : () -> ()
    %cst_45 = arith.constant dense<0.000000e+00> : vector<2x8x8xf32>
    %104 = tpu.matmul %101, %102, %cst_45 {dimension_numbers = #tpu.dot_dimension_numbers<[2], [2], [1], [1], [0, 0, 0, 1, 1, 1], [0], [0]>} : vector<2x8x8xbf16>, vector<2x8x8xbf16>, vector<2x8x8xf32> -> vector<2x8x8xf32>
    "tpu.trace_stop"() : () -> ()
    %cst_46 = arith.constant 0.353553385 : f32
    %105 = vector.broadcast %cst_46 : f32 to vector<2x8x8xf32>
    %106 = arith.mulf %104, %105 : vector<2x8x8xf32>
    %cst_47 = arith.constant dense<0xFF800000> : vector<2x8xf32>
    %107 = vector.multi_reduction <maximumf>, %106, %cst_47 [2] : vector<2x8x8xf32> to vector<2x8xf32>
    %108 = vector.shape_cast %107 : vector<2x8xf32> to vector<2x8x1xf32>
    %109 = vector.broadcast %108 : vector<2x8x1xf32> to vector<2x8x8xf32>
    %110 = arith.subf %106, %109 : vector<2x8x8xf32>
    %111 = math.exp %110 : vector<2x8x8xf32>
    %cst_48 = arith.constant -1.000000e+09 : f32
    %112 = vector.shape_cast %37 : vector<2x1x8xi1> to vector<2x1x8xi1>
    %113 = vector.broadcast %112 : vector<2x1x8xi1> to vector<2x8x8xi1>
    %114 = vector.broadcast %cst_48 : f32 to vector<2x8x8xf32>
    %115 = arith.select %113, %114, %111 : vector<2x8x8xi1>, vector<2x8x8xf32>
    %cst_49 = arith.constant dense<0xFF800000> : vector<2x8xf32>
    %116 = vector.multi_reduction <maximumf>, %115, %cst_49 [2] : vector<2x8x8xf32> to vector<2x8xf32>
    %117 = vector.shape_cast %116 : vector<2x8xf32> to vector<2x8x1xf32>
    %118 = vector.broadcast %117 : vector<2x8x1xf32> to vector<2x8x8xf32>
    %119 = arith.subf %115, %118 : vector<2x8x8xf32>
    %120 = math.exp %119 : vector<2x8x8xf32>
    %cst_50 = arith.constant dense<0.000000e+00> : vector<2x8xf32>
    %121 = vector.multi_reduction <add>, %120, %cst_50 [2] : vector<2x8x8xf32> to vector<2x8xf32>
    %122 = vector.shape_cast %121 : vector<2x8xf32> to vector<2x8x1xf32>
    %123 = vector.broadcast %122 : vector<2x8x1xf32> to vector<2x8x8xf32>
    %124 = arith.divf %120, %123 : vector<2x8x8xf32>
    %125 = arith.truncf %124 : vector<2x8x8xf32> to vector<2x8x8xbf16>
    "tpu.trace_start"() <{level = 10 : i32, message = "bqk,bkd->bqd"}> : () -> ()
    %cst_51 = arith.constant dense<0.000000e+00> : vector<2x8x8xf32>
    %126 = tpu.matmul %125, %103, %cst_51 {dimension_numbers = #tpu.dot_dimension_numbers<[2], [1], [1], [2], [0, 0, 0, 1, 1, 2], [0], [0]>} : vector<2x8x8xbf16>, vector<2x8x8xbf16>, vector<2x8x8xf32> -> vector<2x8x8xf32>
    "tpu.trace_stop"() : () -> ()
    %127 = vector.shape_cast %126 : vector<2x8x8xf32> to vector<16x8xf32>
    %128 = vector.extract_strided_slice %34 {offsets = [16, 0], sizes = [8, 32], strides = [1, 1]} : vector<32x32xbf16> to vector<8x32xbf16>
    %129 = arith.truncf %127 : vector<16x8xf32> to vector<16x8xbf16>
    %cst_52 = arith.constant dense<0.000000e+00> : vector<16x32xf32>
    %130 = tpu.matmul %129, %128, %cst_52 {dimension_numbers = #tpu.dot_dimension_numbers<[1], [0], [0], [1], [0, 0, 1, 1], [], []>} : vector<16x8xbf16>, vector<8x32xbf16>, vector<16x32xf32> -> vector<16x32xf32>
    %131 = arith.addf %100, %130 : vector<16x32xf32>
    %132 = vector.extract_strided_slice %30 {offsets = [0, 0, 24], sizes = [2, 8, 8], strides = [1, 1, 1]} : vector<2x8x32xbf16> to vector<2x8x8xbf16>
    %133 = vector.extract_strided_slice %31 {offsets = [0, 0, 24], sizes = [2, 8, 8], strides = [1, 1, 1]} : vector<2x8x32xbf16> to vector<2x8x8xbf16>
    %134 = vector.extract_strided_slice %32 {offsets = [0, 0, 24], sizes = [2, 8, 8], strides = [1, 1, 1]} : vector<2x8x32xbf16> to vector<2x8x8xbf16>
    "tpu.trace_start"() <{level = 10 : i32, message = "bqd,bkd->bqk"}> : () -> ()
    %cst_53 = arith.constant dense<0.000000e+00> : vector<2x8x8xf32>
    %135 = tpu.matmul %132, %133, %cst_53 {dimension_numbers = #tpu.dot_dimension_numbers<[2], [2], [1], [1], [0, 0, 0, 1, 1, 1], [0], [0]>} : vector<2x8x8xbf16>, vector<2x8x8xbf16>, vector<2x8x8xf32> -> vector<2x8x8xf32>
    "tpu.trace_stop"() : () -> ()
    %cst_54 = arith.constant 0.353553385 : f32
    %136 = vector.broadcast %cst_54 : f32 to vector<2x8x8xf32>
    %137 = arith.mulf %135, %136 : vector<2x8x8xf32>
    %cst_55 = arith.constant dense<0xFF800000> : vector<2x8xf32>
    %138 = vector.multi_reduction <maximumf>, %137, %cst_55 [2] : vector<2x8x8xf32> to vector<2x8xf32>
    %139 = vector.shape_cast %138 : vector<2x8xf32> to vector<2x8x1xf32>
    %140 = vector.broadcast %139 : vector<2x8x1xf32> to vector<2x8x8xf32>
    %141 = arith.subf %137, %140 : vector<2x8x8xf32>
    %142 = math.exp %141 : vector<2x8x8xf32>
    %cst_56 = arith.constant -1.000000e+09 : f32
    %143 = vector.shape_cast %37 : vector<2x1x8xi1> to vector<2x1x8xi1>
    %144 = vector.broadcast %143 : vector<2x1x8xi1> to vector<2x8x8xi1>
    %145 = vector.broadcast %cst_56 : f32 to vector<2x8x8xf32>
    %146 = arith.select %144, %145, %142 : vector<2x8x8xi1>, vector<2x8x8xf32>
    %cst_57 = arith.constant dense<0xFF800000> : vector<2x8xf32>
    %147 = vector.multi_reduction <maximumf>, %146, %cst_57 [2] : vector<2x8x8xf32> to vector<2x8xf32>
    %148 = vector.shape_cast %147 : vector<2x8xf32> to vector<2x8x1xf32>
    %149 = vector.broadcast %148 : vector<2x8x1xf32> to vector<2x8x8xf32>
    %150 = arith.subf %146, %149 : vector<2x8x8xf32>
    %151 = math.exp %150 : vector<2x8x8xf32>
    %cst_58 = arith.constant dense<0.000000e+00> : vector<2x8xf32>
    %152 = vector.multi_reduction <add>, %151, %cst_58 [2] : vector<2x8x8xf32> to vector<2x8xf32>
    %153 = vector.shape_cast %152 : vector<2x8xf32> to vector<2x8x1xf32>
    %154 = vector.broadcast %153 : vector<2x8x1xf32> to vector<2x8x8xf32>
    %155 = arith.divf %151, %154 : vector<2x8x8xf32>
    %156 = arith.truncf %155 : vector<2x8x8xf32> to vector<2x8x8xbf16>
    "tpu.trace_start"() <{level = 10 : i32, message = "bqk,bkd->bqd"}> : () -> ()
    %cst_59 = arith.constant dense<0.000000e+00> : vector<2x8x8xf32>
    %157 = tpu.matmul %156, %134, %cst_59 {dimension_numbers = #tpu.dot_dimension_numbers<[2], [1], [1], [2], [0, 0, 0, 1, 1, 2], [0], [0]>} : vector<2x8x8xbf16>, vector<2x8x8xbf16>, vector<2x8x8xf32> -> vector<2x8x8xf32>
    "tpu.trace_stop"() : () -> ()
    %158 = vector.shape_cast %157 : vector<2x8x8xf32> to vector<16x8xf32>
    %159 = vector.extract_strided_slice %34 {offsets = [24, 0], sizes = [8, 32], strides = [1, 1]} : vector<32x32xbf16> to vector<8x32xbf16>
    %160 = arith.truncf %158 : vector<16x8xf32> to vector<16x8xbf16>
    %cst_60 = arith.constant dense<0.000000e+00> : vector<16x32xf32>
    %161 = tpu.matmul %160, %159, %cst_60 {dimension_numbers = #tpu.dot_dimension_numbers<[1], [0], [0], [1], [0, 0, 1, 1], [], []>} : vector<16x8xbf16>, vector<8x32xbf16>, vector<16x32xf32> -> vector<16x32xf32>
    %162 = arith.addf %131, %161 : vector<16x32xf32>
    %c0_61 = arith.constant 0 : index
    %c0_62 = arith.constant 0 : index
    %163 = vector.load %arg12[%c0_61, %c0_62] : memref<1x32xf32, #tpu.memory_space<vmem>>, vector<1x32xf32>
    %164 = vector.broadcast %163 : vector<1x32xf32> to vector<16x32xf32>
    %165 = arith.addf %162, %164 : vector<16x32xf32>
    %166 = vector.shape_cast %165 : vector<16x32xf32> to vector<2x8x32xf32>
    %c0_63 = arith.constant 0 : index
    %c0_64 = arith.constant 0 : index
    %c0_65 = arith.constant 0 : index
    %167 = vector.load %arg13[%c0_63, %c0_64, %c0_65] : memref<2x8x32xf32, #tpu.memory_space<vmem>>, vector<2x8x32xf32>
    tpu.vector_store %arg13[%c0_63, %c0_64, %c0_65], %166 {strides = array<i32>} : memref<2x8x32xf32, #tpu.memory_space<vmem>>, vector<2x8x32xf32>,
    return
  }
  func.func @transform_0(%arg0: i32) -> (i32, i32, i32) {
    %c0_i32 = arith.constant 0 : i32
    %c0_i32_0 = arith.constant 0 : i32
    %c0_i32_1 = arith.constant 0 : i32
    return %arg0, %c0_i32, %c0_i32_0 : i32, i32, i32
  }
  func.func @transform_1(%arg0: i32) -> (i32, i32, i32) {
    %c0_i32 = arith.constant 0 : i32
    %c0_i32_0 = arith.constant 0 : i32
    %c0_i32_1 = arith.constant 0 : i32
    return %arg0, %c0_i32, %c0_i32_0 : i32, i32, i32
  }
  func.func @transform_2(%arg0: i32) -> (i32, i32, i32) {
    %c0_i32 = arith.constant 0 : i32
    %c0_i32_0 = arith.constant 0 : i32
    %c0_i32_1 = arith.constant 0 : i32
    return %arg0, %c0_i32, %c0_i32_0 : i32, i32, i32
  }
  func.func @transform_3(%arg0: i32) -> (i32, i32, i32) {
    %c0_i32 = arith.constant 0 : i32
    %c0_i32_0 = arith.constant 0 : i32
    %c0_i32_1 = arith.constant 0 : i32
    return %arg0, %c0_i32, %c0_i32_0 : i32, i32, i32
  }
  func.func @transform_4(%arg0: i32) -> (i32, i32) {
    %c0_i32 = arith.constant 0 : i32
    %c0_i32_0 = arith.constant 0 : i32
    %c0_i32_1 = arith.constant 0 : i32
    return %c0_i32, %c0_i32_0 : i32, i32
  }
  func.func @transform_5(%arg0: i32) -> (i32, i32) {
    %c0_i32 = arith.constant 0 : i32
    %c0_i32_0 = arith.constant 0 : i32
    %c0_i32_1 = arith.constant 0 : i32
    return %c0_i32, %c0_i32_0 : i32, i32
  }
  func.func @transform_6(%arg0: i32) -> (i32, i32) {
    %c0_i32 = arith.constant 0 : i32
    %c0_i32_0 = arith.constant 0 : i32
    %c0_i32_1 = arith.constant 0 : i32
    return %c0_i32, %c0_i32_0 : i32, i32
  }
  func.func @transform_7(%arg0: i32) -> (i32, i32) {
    %c0_i32 = arith.constant 0 : i32
    %c0_i32_0 = arith.constant 0 : i32
    %c0_i32_1 = arith.constant 0 : i32
    return %c0_i32, %c0_i32_0 : i32, i32
  }
  func.func @transform_8(%arg0: i32) -> (i32, i32) {
    %c0_i32 = arith.constant 0 : i32
    %c0_i32_0 = arith.constant 0 : i32
    %c0_i32_1 = arith.constant 0 : i32
    return %c0_i32, %c0_i32_0 : i32, i32
  }
  func.func @transform_9(%arg0: i32) -> (i32, i32) {
    %c0_i32 = arith.constant 0 : i32
    %c0_i32_0 = arith.constant 0 : i32
    %c0_i32_1 = arith.constant 0 : i32
    return %c0_i32, %c0_i32_0 : i32, i32
  }
  func.func @transform_10(%arg0: i32) -> (i32, i32) {
    %c0_i32 = arith.constant 0 : i32
    %c0_i32_0 = arith.constant 0 : i32
    %c0_i32_1 = arith.constant 0 : i32
    return %c0_i32, %c0_i32_0 : i32, i32
  }
  func.func @transform_11(%arg0: i32) -> (i32, i32) {
    %c0_i32 = arith.constant 0 : i32
    %c0_i32_0 = arith.constant 0 : i32
    %c0_i32_1 = arith.constant 0 : i32
    return %c0_i32, %c0_i32_0 : i32, i32
  }
  func.func @transform_12(%arg0: i32) -> (i32, i32, i32) {
    %c0_i32 = arith.constant 0 : i32
    %c0_i32_0 = arith.constant 0 : i32
    %c0_i32_1 = arith.constant 0 : i32
    return %arg0, %c0_i32, %c0_i32_0 : i32, i32, i32
  }
}

</mosaic_0001>

<llo_original>
// kernel: tpu_custom_call.1
$region0: #{tpu_custom_call.1}
  #allocation0 [shape = 'u32[]', space=smem, size = 0x4, offset = 0x4, fixed_abs, tag = 'smem constant byte address 0x4 - core index']
  #allocation1 [shape = 'u32[144,128]{1,0:T(1,128)}', space=vmem, size = 0x12000, scoped, tag = 'internal scratch']
  %s0 = inlined_call_operand.hbm [shape: f32[2,8,32], index: 0, kind: input, shape index: {}]
  %s1 = inlined_call_operand.hbm [shape: f32[2,8,32], index: 1, kind: input, shape index: {}]
  %s2 = inlined_call_operand.hbm [shape: f32[2,8,32], index: 2, kind: input, shape index: {}]
  %s3 = inlined_call_operand.vmem [shape: f32[2,1,8], index: 3, kind: input, shape index: {}]
  %s4 = inlined_call_operand.hbm [shape: f32[32,32], index: 4, kind: input, shape index: {}]
  %s5 = inlined_call_operand.vmem [shape: f32[1,32], index: 5, kind: input, shape index: {}]
  %s6 = inlined_call_operand.hbm [shape: f32[32,32], index: 6, kind: input, shape index: {}]
  %s7 = inlined_call_operand.vmem [shape: f32[1,32], index: 7, kind: input, shape index: {}]
  %s8 = inlined_call_operand.hbm [shape: f32[32,32], index: 8, kind: input, shape index: {}]
  %s9 = inlined_call_operand.vmem [shape: f32[1,32], index: 9, kind: input, shape index: {}]
  %s10 = inlined_call_operand.hbm [shape: f32[32,32], index: 10, kind: input, shape index: {}]
  %s11 = inlined_call_operand.vmem [shape: f32[1,32], index: 11, kind: input, shape index: {}]
  %s12 = inlined_call_operand.hbm [shape: f32[2,8,32], index: 12, kind: output, shape index: {}]
  %s13 = sld [smem:[#allocation0]]
  $region86: #{tpu_custom_call.1} parent=0
    _
  %s15 = ssub.s32 1, %s13
  %s16 = scalar_select 0, %s15, %s13
  $region1: #{tpu_custom_call.1} parent=0
    #allocation2 [shape = 'u8[8192]{0}', space=vmem, size = 0x2000, scoped, tag = 'input window, operand 0, single buffered']
    #allocation3 [shape = 's32[1]{0}', space=sflag, size = 0x4, scoped, tag = 'scoped memory for tpu_custom_call.1']
    #allocation4 [shape = 's32[1]{0}', space=sflag, size = 0x4, scoped, tag = 'scoped memory for tpu_custom_call.1']
    #allocation5 [shape = 'u8[8192]{0}', space=vmem, size = 0x2000, scoped, tag = 'input window, operand 1, single buffered']
    #allocation6 [shape = 's32[1]{0}', space=sflag, size = 0x4, scoped, tag = 'scoped memory for tpu_custom_call.1']
    #allocation7 [shape = 'u8[8192]{0}', space=vmem, size = 0x2000, scoped, tag = 'input window, operand 2, single buffered']
    #allocation8 [shape = 'u8[16384]{0}', space=vmem, size = 0x4000, scoped, tag = 'input window, operand 4, single buffered']
    #allocation9 [shape = 's32[1]{0}', space=sflag, size = 0x4, scoped, tag = 'scoped memory for tpu_custom_call.1']
    #allocation10 [shape = 'u8[16384]{0}', space=vmem, size = 0x4000, scoped, tag = 'input window, operand 6, single buffered']
    #allocation11 [shape = 'u8[16384]{0}', space=vmem, size = 0x4000, scoped, tag = 'input window, operand 8, single buffered']
    #allocation12 [shape = 's32[1]{0}', space=sflag, size = 0x4, scoped, tag = 'scoped memory for tpu_custom_call.1']
    #allocation13 [shape = 'u8[16384]{0}', space=vmem, size = 0x4000, scoped, tag = 'input window, operand 10, single buffered']
    #allocation14 [shape = 'u8[8192]{0}', space=vmem, size = 0x2000, scoped, tag = 'output window, operand 0, single buffered']
    %17 = vsyncpa [#allocation3], 0
    %18 = vsyncpa [#allocation6], 0
    %19 = vsyncpa [#allocation9], 0
    %20 = vsyncpa [#allocation12], 0
    %21 = vsyncpa [#allocation4], 0
    // Predicated region
    $region2: #{tpu_custom_call.1} parent=1 // pred_check
      _
    $region3: #{tpu_custom_call.1} parent=1 // pred_check_branch
      %23 = sbr.rel (0) target = $region5
    $region4: #{tpu_custom_call.1} parent=1 // pred_region
      %s25 = ssub.s32 256, 256
      %26 = vsyncadd [#allocation3], %s25
      %s27 = sshll.u32 [#allocation2], 4
      %s28 = int_to_ptr.vmem [resolvable:$true] %s27
      %33 = dma.hbm_to_vmem [thread:$0]  %s0, 256, %s28, [#allocation3], 128, 128, 8
    $region5: #{tpu_custom_call.1} parent=1 // pred_fallthru
      _
    // Predicated region
    $region6: #{tpu_custom_call.1} parent=1 // pred_check
      _
    $region7: #{tpu_custom_call.1} parent=1 // pred_check_branch
      %35 = sbr.rel (0) target = $region9
    $region8: #{tpu_custom_call.1} parent=1 // pred_region
      %s37 = ssub.s32 256, 256
      %38 = vsyncadd [#allocation6], %s37
      %s39 = sshll.u32 [#allocation5], 4
      %s40 = int_to_ptr.vmem [resolvable:$true] %s39
      %45 = dma.hbm_to_vmem [thread:$0]  %s1, 256, %s40, [#allocation6], 128, 128, 8
    $region9: #{tpu_custom_call.1} parent=1 // pred_fallthru
      _
    // Predicated region
    $region10: #{tpu_custom_call.1} parent=1 // pred_check
      _
    $region11: #{tpu_custom_call.1} parent=1 // pred_check_branch
      %47 = sbr.rel (0) target = $region13
    $region12: #{tpu_custom_call.1} parent=1 // pred_region
      %s49 = ssub.s32 256, 256
      %50 = vsyncadd [#allocation6], %s49
      %s51 = sshll.u32 [#allocation7], 4
      %s52 = int_to_ptr.vmem [resolvable:$true] %s51
      %57 = dma.hbm_to_vmem [thread:$0]  %s2, 256, %s52, [#allocation6], 128, 128, 8
    $region13: #{tpu_custom_call.1} parent=1 // pred_fallthru
      _
    // Predicated region
    $region14: #{tpu_custom_call.1} parent=1 // pred_check
      _
    $region15: #{tpu_custom_call.1} parent=1 // pred_check_branch
      %59 = sbr.rel (0) target = $region17
    $region16: #{tpu_custom_call.1} parent=1 // pred_region
      _
    $region17: #{tpu_custom_call.1} parent=1 // pred_fallthru
      _
    // Predicated region
    $region18: #{tpu_custom_call.1} parent=1 // pred_check
      _
    $region19: #{tpu_custom_call.1} parent=1 // pred_check_branch
      %61 = sbr.rel (0) target = $region21
    $region20: #{tpu_custom_call.1} parent=1 // pred_region
      %s63 = ssub.s32 512, 512
      %64 = vsyncadd [#allocation9], %s63
      %s65 = sshll.u32 [#allocation8], 4
      %s66 = int_to_ptr.vmem [resolvable:$true] %s65
      %71 = dma.hbm_to_vmem [thread:$0]  %s4, 512, %s66, [#allocation9], 128, 128, 8
    $region21: #{tpu_custom_call.1} parent=1 // pred_fallthru
      _
    // Predicated region
    $region22: #{tpu_custom_call.1} parent=1 // pred_check
      _
    $region23: #{tpu_custom_call.1} parent=1 // pred_check_branch
      %73 = sbr.rel (0) target = $region25
    $region24: #{tpu_custom_call.1} parent=1 // pred_region
      _
    $region25: #{tpu_custom_call.1} parent=1 // pred_fallthru
      _
    // Predicated region
    $region26: #{tpu_custom_call.1} parent=1 // pred_check
      _
    $region27: #{tpu_custom_call.1} parent=1 // pred_check_branch
      %75 = sbr.rel (0) target = $region29
    $region28: #{tpu_custom_call.1} parent=1 // pred_region
      %s77 = ssub.s32 512, 512
      %78 = vsyncadd [#allocation9], %s77
      %s79 = sshll.u32 [#allocation10], 4
      %s80 = int_to_ptr.vmem [resolvable:$true] %s79
      %85 = dma.hbm_to_vmem [thread:$0]  %s6, 512, %s80, [#allocation9], 128, 128, 8
    $region29: #{tpu_custom_call.1} parent=1 // pred_fallthru
      _
    // Predicated region
    $region30: #{tpu_custom_call.1} parent=1 // pred_check
      _
    $region31: #{tpu_custom_call.1} parent=1 // pred_check_branch
      %87 = sbr.rel (0) target = $region33
    $region32: #{tpu_custom_call.1} parent=1 // pred_region
      _
    $region33: #{tpu_custom_call.1} parent=1 // pred_fallthru
      _
    // Predicated region
    $region34: #{tpu_custom_call.1} parent=1 // pred_check
      _
    $region35: #{tpu_custom_call.1} parent=1 // pred_check_branch
      %89 = sbr.rel (0) target = $region37
    $region36: #{tpu_custom_call.1} parent=1 // pred_region
      %s91 = ssub.s32 512, 512
      %92 = vsyncadd [#allocation12], %s91
      %s93 = sshll.u32 [#allocation11], 4
      %s94 = int_to_ptr.vmem [resolvable:$true] %s93
      %99 = dma.hbm_to_vmem [thread:$0]  %s8, 512, %s94, [#allocation12], 128, 128, 8
    $region37: #{tpu_custom_call.1} parent=1 // pred_fallthru
      _
    // Predicated region
    $region38: #{tpu_custom_call.1} parent=1 // pred_check
      _
    $region39: #{tpu_custom_call.1} parent=1 // pred_check_branch
      %101 = sbr.rel (0) target = $region41
    $region40: #{tpu_custom_call.1} parent=1 // pred_region
      _
    $region41: #{tpu_custom_call.1} parent=1 // pred_fallthru
      _
    // Predicated region
    $region42: #{tpu_custom_call.1} parent=1 // pred_check
      _
    $region43: #{tpu_custom_call.1} parent=1 // pred_check_branch
      %103 = sbr.rel (0) target = $region45
    $region44: #{tpu_custom_call.1} parent=1 // pred_region
      %s105 = ssub.s32 512, 512
      %106 = vsyncadd [#allocation12], %s105
      %s107 = sshll.u32 [#allocation13], 4
      %s108 = int_to_ptr.vmem [resolvable:$true] %s107
      %113 = dma.hbm_to_vmem [thread:$0]  %s10, 512, %s108, [#allocation12], 128, 128, 8
    $region45: #{tpu_custom_call.1} parent=1 // pred_fallthru
      _
    // Predicated region
    $region46: #{tpu_custom_call.1} parent=1 // pred_check
      _
    $region47: #{tpu_custom_call.1} parent=1 // pred_check_branch
      %115 = sbr.rel (0) target = $region49
    $region48: #{tpu_custom_call.1} parent=1 // pred_region
      _
    $region49: #{tpu_custom_call.1} parent=1 // pred_fallthru
      _
    // Predicated region
    $region50: #{tpu_custom_call.1} parent=1 // pred_check
      _
    $region51: #{tpu_custom_call.1} parent=1 // pred_check_branch
      %117 = sbr.rel (0) target = $region53
    $region52: #{tpu_custom_call.1} parent=1 // pred_region
      %118 = dma.done [#allocation3], 256
    $region53: #{tpu_custom_call.1} parent=1 // pred_fallthru
      _
    // Predicated region
    $region54: #{tpu_custom_call.1} parent=1 // pred_check
      _
    $region55: #{tpu_custom_call.1} parent=1 // pred_check_branch
      %120 = sbr.rel (0) target = $region57
    $region56: #{tpu_custom_call.1} parent=1 // pred_region
      %121 = dma.done [#allocation6], 256
    $region57: #{tpu_custom_call.1} parent=1 // pred_fallthru
      _
    // Predicated region
    $region58: #{tpu_custom_call.1} parent=1 // pred_check
      _
    $region59: #{tpu_custom_call.1} parent=1 // pred_check_branch
      %123 = sbr.rel (0) target = $region61
    $region60: #{tpu_custom_call.1} parent=1 // pred_region
      %124 = dma.done [#allocation6], 256
    $region61: #{tpu_custom_call.1} parent=1 // pred_fallthru
      _
    // Predicated region
    $region62: #{tpu_custom_call.1} parent=1 // pred_check
      _
    $region63: #{tpu_custom_call.1} parent=1 // pred_check_branch
      %126 = sbr.rel (0) target = $region65
    $region64: #{tpu_custom_call.1} parent=1 // pred_region
      %127 = dma.done [#allocation9], 512
    $region65: #{tpu_custom_call.1} parent=1 // pred_fallthru
      _
    // Predicated region
    $region66: #{tpu_custom_call.1} parent=1 // pred_check
      _
    $region67: #{tpu_custom_call.1} parent=1 // pred_check_branch
      %129 = sbr.rel (0) target = $region69
    $region68: #{tpu_custom_call.1} parent=1 // pred_region
      %130 = dma.done [#allocation9], 512
    $region69: #{tpu_custom_call.1} parent=1 // pred_fallthru
      _
    // Predicated region
    $region70: #{tpu_custom_call.1} parent=1 // pred_check
      _
    $region71: #{tpu_custom_call.1} parent=1 // pred_check_branch
      %132 = sbr.rel (0) target = $region73
    $region72: #{tpu_custom_call.1} parent=1 // pred_region
      %133 = dma.done [#allocation12], 512
    $region73: #{tpu_custom_call.1} parent=1 // pred_fallthru
      _
    // Predicated region
    $region74: #{tpu_custom_call.1} parent=1 // pred_check
      _
    $region75: #{tpu_custom_call.1} parent=1 // pred_check_branch
      %135 = sbr.rel (0) target = $region77
    $region76: #{tpu_custom_call.1} parent=1 // pred_region
      %136 = dma.done [#allocation12], 512
    $region77: #{tpu_custom_call.1} parent=1 // pred_fallthru
      _
    %v138 = vld [vmem:[#allocation2] sm:$0xff]
    %v139 = vld [vmem:[#allocation2 + $0x8] sm:$0xff]
    %v140 = vld [vmem:[#allocation5] sm:$0xff]
    %v141 = vld [vmem:[#allocation5 + $0x8] sm:$0xff]
    %v142 = vld [vmem:[#allocation7] sm:$0xff]
    %v143 = vld [vmem:[#allocation7 + $0x8] sm:$0xff]
    %v144 = vld [vmem:[#allocation8] sm:$0xff]
    %v145 = vld [vmem:[#allocation8 + $0x8] sm:$0xff]
    %v146 = vld [vmem:[#allocation8 + $0x10] sm:$0xff]
    %v147 = vld [vmem:[#allocation8 + $0x18] sm:$0xff]
    %v148 = vpack.c.bf16 %v139, %v138
    %v149 = vpack.c.bf16 %v145, %v144
    %v150 = vpack.c.bf16 %v147, %v146
    %v151 = vld [vmem:[%s5] sm:$0x1]
    %v153 = vlaneseq
    %v154 = vshrl.u32 %v153, 7
    %v155 = vsub.s32 0, %v154
    %v156 = vrot.slane %v151, %v155
    %vm158 = vcmask 261120
    %v160 = vsel %vm158, %v148, 0
    %162 = vmatprep.subr.bf16.mxu0 0
    %163 = vmatpush1.bf16.msra.mxu0 0
    %164 = vmatprep.subr.bf16.mxu0 0
    %165 = vmatpush1.bf16.msra.mxu0 0
    %166 = vmatprep.subr.bf16.mxu0 0
    %167 = vmatpush1.bf16.msra.mxu0 0
    %168 = vmatprep.subr.bf16.mxu0 0
    %169 = vmatpush1.bf16.msra.mxu0 0
    %170 = vmatprep.subr.bf16.mxu0 0
    %171 = vmatpush1.bf16.msra.mxu0 0
    %172 = vmatprep.subr.bf16.mxu0 0
    %173 = vmatpush1.bf16.msra.mxu0 0
    %174 = vmatprep.subr.bf16.mxu0 0
    %175 = vmatpush1.bf16.msra.mxu0 %v150
    %176 = vmatprep.subr.bf16.mxu0 0
    %177 = vmatpush1.bf16.msra.mxu0 %v149
    %178 = vmatprep.subr.bf16.mxu0 0
    %179 = vmatpush2.bf16.msra.mxu0 0
    %180 = vmatprep.subr.bf16.mxu0 0
    %181 = vmatpush2.bf16.msra.mxu0 0
    %182 = vmatprep.subr.bf16.mxu0 0
    %183 = vmatpush2.bf16.msra.mxu0 0
    %184 = vmatprep.subr.bf16.mxu0 0
    %185 = vmatpush2.bf16.msra.mxu0 0
    %186 = vmatprep.subr.bf16.mxu0 0
    %187 = vmatpush2.bf16.msra.mxu0 0
    %188 = vmatprep.subr.bf16.mxu0 0
    %189 = vmatpush2.bf16.msra.mxu0 0
    %190 = vmatprep.subr.bf16.mxu0 0
    %191 = vmatpush2.bf16.msra.mxu0 0
    %192 = vmatprep.subr.bf16.mxu0 0
    %193 = vmatpush2.bf16.msra.mxu0 0
    %194 = vmatprep.mubr.bf16.mxu0 0
    %195 = vmatmul.mubr.bf16.gmra.mxu0 %v160
    %v196 = vpop.f32.mrf.mxu0
    %v197 = vadd.f32 %v156, %v196
    %v198 = vpop.f32.mrf.mxu0
    %v199 = vpop.f32.mrf.mxu0
    %v200 = vadd.f32 %v156, %v199
    %v201 = vpop.f32.mrf.mxu0
    %202 = vdwg.mxu0
    %v203 = vld [vmem:[#allocation10] sm:$0xff]
    %v204 = vld [vmem:[#allocation10 + $0x8] sm:$0xff]
    %v205 = vld [vmem:[#allocation10 + $0x10] sm:$0xff]
    %v206 = vld [vmem:[#allocation10 + $0x18] sm:$0xff]
    %v207 = vpack.c.bf16 %v141, %v140
    %v208 = vpack.c.bf16 %v204, %v203
    %v209 = vpack.c.bf16 %v206, %v205
    %v210 = vld [vmem:[%s7] sm:$0x1]
    %v212 = vlaneseq
    %v213 = vshrl.u32 %v212, 7
    %v214 = vsub.s32 0, %v213
    %v215 = vrot.slane %v210, %v214
    %v218 = vsel %vm158, %v207, 0
    %220 = vmatprep.subr.bf16.mxu0 0
    %221 = vmatpush1.bf16.msra.mxu0 0
    %222 = vmatprep.subr.bf16.mxu0 0
    %223 = vmatpush1.bf16.msra.mxu0 0
    %224 = vmatprep.subr.bf16.mxu0 0
    %225 = vmatpush1.bf16.msra.mxu0 0
    %226 = vmatprep.subr.bf16.mxu0 0
    %227 = vmatpush1.bf16.msra.mxu0 0
    %228 = vmatprep.subr.bf16.mxu0 0
    %229 = vmatpush1.bf16.msra.mxu0 0
    %230 = vmatprep.subr.bf16.mxu0 0
    %231 = vmatpush1.bf16.msra.mxu0 0
    %232 = vmatprep.subr.bf16.mxu0 0
    %233 = vmatpush1.bf16.msra.mxu0 %v209
    %234 = vmatprep.subr.bf16.mxu0 0
    %235 = vmatpush1.bf16.msra.mxu0 %v208
    %236 = vmatprep.subr.bf16.mxu0 0
    %237 = vmatpush2.bf16.msra.mxu0 0
    %238 = vmatprep.subr.bf16.mxu0 0
    %239 = vmatpush2.bf16.msra.mxu0 0
    %240 = vmatprep.subr.bf16.mxu0 0
    %241 = vmatpush2.bf16.msra.mxu0 0
    %242 = vmatprep.subr.bf16.mxu0 0
    %243 = vmatpush2.bf16.msra.mxu0 0
    %244 = vmatprep.subr.bf16.mxu0 0
    %245 = vmatpush2.bf16.msra.mxu0 0
    %246 = vmatprep.subr.bf16.mxu0 0
    %247 = vmatpush2.bf16.msra.mxu0 0
    %248 = vmatprep.subr.bf16.mxu0 0
    %249 = vmatpush2.bf16.msra.mxu0 0
    %250 = vmatprep.subr.bf16.mxu0 0
    %251 = vmatpush2.bf16.msra.mxu0 0
    %252 = vmatprep.mubr.bf16.mxu0 0
    %253 = vmatmul.mubr.bf16.gmra.mxu0 %v218
    %v254 = vpop.f32.mrf.mxu0
    %v255 = vadd.f32 %v215, %v254
    %v256 = vpop.f32.mrf.mxu0
    %v257 = vpop.f32.mrf.mxu0
    %v258 = vadd.f32 %v215, %v257
    %v259 = vpop.f32.mrf.mxu0
    %260 = vdwg.mxu0
    %v261 = vld [vmem:[#allocation11] sm:$0xff]
    %v262 = vld [vmem:[#allocation11 + $0x8] sm:$0xff]
    %v263 = vld [vmem:[#allocation11 + $0x10] sm:$0xff]
    %v264 = vld [vmem:[#allocation11 + $0x18] sm:$0xff]
    %v265 = vpack.c.bf16 %v143, %v142
    %v266 = vpack.c.bf16 %v262, %v261
    %v267 = vpack.c.bf16 %v264, %v263
    %v268 = vld [vmem:[%s9] sm:$0x1]
    %v270 = vlaneseq
    %v271 = vshrl.u32 %v270, 7
    %v272 = vsub.s32 0, %v271
    %v273 = vrot.slane %v268, %v272
    %v276 = vsel %vm158, %v265, 0
    %278 = vmatprep.subr.bf16.mxu0 0
    %279 = vmatpush1.bf16.msra.mxu0 0
    %280 = vmatprep.subr.bf16.mxu0 0
    %281 = vmatpush1.bf16.msra.mxu0 0
    %282 = vmatprep.subr.bf16.mxu0 0
    %283 = vmatpush1.bf16.msra.mxu0 0
    %284 = vmatprep.subr.bf16.mxu0 0
    %285 = vmatpush1.bf16.msra.mxu0 0
    %286 = vmatprep.subr.bf16.mxu0 0
    %287 = vmatpush1.bf16.msra.mxu0 0
    %288 = vmatprep.subr.bf16.mxu0 0
    %289 = vmatpush1.bf16.msra.mxu0 0
    %290 = vmatprep.subr.bf16.mxu0 0
    %291 = vmatpush1.bf16.msra.mxu0 %v267
    %292 = vmatprep.subr.bf16.mxu0 0
    %293 = vmatpush1.bf16.msra.mxu0 %v266
    %294 = vmatprep.subr.bf16.mxu0 0
    %295 = vmatpush2.bf16.msra.mxu0 0
    %296 = vmatprep.subr.bf16.mxu0 0
    %297 = vmatpush2.bf16.msra.mxu0 0
    %298 = vmatprep.subr.bf16.mxu0 0
    %299 = vmatpush2.bf16.msra.mxu0 0
    %300 = vmatprep.subr.bf16.mxu0 0
    %301 = vmatpush2.bf16.msra.mxu0 0
    %302 = vmatprep.subr.bf16.mxu0 0
    %303 = vmatpush2.bf16.msra.mxu0 0
    %304 = vmatprep.subr.bf16.mxu0 0
    %305 = vmatpush2.bf16.msra.mxu0 0
    %306 = vmatprep.subr.bf16.mxu0 0
    %307 = vmatpush2.bf16.msra.mxu0 0
    %308 = vmatprep.subr.bf16.mxu0 0
    %309 = vmatpush2.bf16.msra.mxu0 0
    %310 = vmatprep.mubr.bf16.mxu0 0
    %311 = vmatmul.mubr.bf16.gmra.mxu0 %v276
    %v312 = vpop.f32.mrf.mxu0
    %v313 = vadd.f32 %v273, %v312
    %v314 = vpop.f32.mrf.mxu0
    %v315 = vpop.f32.mrf.mxu0
    %v316 = vadd.f32 %v273, %v315
    %v317 = vpop.f32.mrf.mxu0
    %318 = vdwg.mxu0
    %v319 = vpack.c.bf16 %v197, %v197
    %v320 = vpack.c.bf16 %v200, %v200
    %v321 = vpack.c.bf16 %v255, %v255
    %v322 = vpack.c.bf16 %v258, %v258
    %v323 = vpack.c.bf16 %v313, %v313
    %v324 = vpack.c.bf16 %v316, %v316
    %v325 = vld [vmem:[#allocation13] sm:$0xff]
    %v326 = vld [vmem:[#allocation13 + $0x8] sm:$0xff]
    %v327 = vld [vmem:[#allocation13 + $0x10] sm:$0xff]
    %v328 = vld [vmem:[#allocation13 + $0x18] sm:$0xff]
    %v329 = vpack.c.bf16 %v326, %v325
    %v330 = vpack.c.bf16 %v328, %v327
    %v331 = vld [vmem:[%s3] sm:$0x1]
    %v332 = vld [vmem:[%s3 + $0x1] sm:$0x1]
    %vm333 = vcmp.gt.f32.partialorder %v331, 0.5
    %vm334 = vcmp.gt.f32.partialorder %v332, 0.5
    %vm335 = vcmask 64512
    %v337 = vsel %vm335, %v319, 0
    %v340 = vsel %vm335, %v321, 0
    %342 = vmatprep.subr.bf16.mxu0 0
    %343 = vmatpush1.bf16.xpose.msra.mxu0 0
    %344 = vmatprep.subr.bf16.mxu0 0
    %345 = vmatpush1.bf16.xpose.msra.mxu0 0
    %346 = vmatprep.subr.bf16.mxu0 0
    %347 = vmatpush1.bf16.xpose.msra.mxu0 0
    %348 = vmatprep.subr.bf16.mxu0 0
    %349 = vmatpush1.bf16.xpose.msra.mxu0 0
    %350 = vmatprep.subr.bf16.mxu0 0
    %351 = vmatpush1.bf16.xpose.msra.mxu0 0
    %352 = vmatprep.subr.bf16.mxu0 0
    %353 = vmatpush1.bf16.xpose.msra.mxu0 0
    %354 = vmatprep.subr.bf16.mxu0 0
    %355 = vmatpush1.bf16.xpose.msra.mxu0 0
    %356 = vmatprep.subr.bf16.mxu0 0
    %357 = vmatpush1.bf16.xpose.msra.mxu0 %v340
    %358 = vmatprep.subr.bf16.mxu0 0
    %359 = vmatpush2.bf16.xpose.msra.mxu0 0
    %360 = vmatprep.subr.bf16.mxu0 0
    %361 = vmatpush2.bf16.xpose.msra.mxu0 0
    %362 = vmatprep.subr.bf16.mxu0 0
    %363 = vmatpush2.bf16.xpose.msra.mxu0 0
    %364 = vmatprep.subr.bf16.mxu0 0
    %365 = vmatpush2.bf16.xpose.msra.mxu0 0
    %366 = vmatprep.subr.bf16.mxu0 0
    %367 = vmatpush2.bf16.xpose.msra.mxu0 0
    %368 = vmatprep.subr.bf16.mxu0 0
    %369 = vmatpush2.bf16.xpose.msra.mxu0 0
    %370 = vmatprep.subr.bf16.mxu0 0
    %371 = vmatpush2.bf16.xpose.msra.mxu0 0
    %372 = vmatprep.subr.bf16.mxu0 0
    %373 = vmatpush2.bf16.xpose.msra.mxu0 0
    %374 = vmatprep.mubr.bf16.mxu0 0
    %375 = vmatmul.mubr.bf16.gmra.mxu0 %v337
    %v376 = vpop.f32.mrf.mxu0
    %v377 = vadd.f32 0.0, %v376
    %v378 = vpop.f32.mrf.mxu0
    %v379 = vpop.f32.mrf.mxu0
    %v380 = vpop.f32.mrf.mxu0
    %381 = vdwg.mxu0
    %v383 = vsel %vm335, %v320, 0
    %v386 = vsel %vm335, %v322, 0
    %388 = vmatprep.subr.bf16.mxu0 0
    %389 = vmatpush1.bf16.xpose.msra.mxu0 0
    %390 = vmatprep.subr.bf16.mxu0 0
    %391 = vmatpush1.bf16.xpose.msra.mxu0 0
    %392 = vmatprep.subr.bf16.mxu0 0
    %393 = vmatpush1.bf16.xpose.msra.mxu0 0
    %394 = vmatprep.subr.bf16.mxu0 0
    %395 = vmatpush1.bf16.xpose.msra.mxu0 0
    %396 = vmatprep.subr.bf16.mxu0 0
    %397 = vmatpush1.bf16.xpose.msra.mxu0 0
    %398 = vmatprep.subr.bf16.mxu0 0
    %399 = vmatpush1.bf16.xpose.msra.mxu0 0
    %400 = vmatprep.subr.bf16.mxu0 0
    %401 = vmatpush1.bf16.xpose.msra.mxu0 0
    %402 = vmatprep.subr.bf16.mxu0 0
    %403 = vmatpush1.bf16.xpose.msra.mxu0 %v386
    %404 = vmatprep.subr.bf16.mxu0 0
    %405 = vmatpush2.bf16.xpose.msra.mxu0 0
    %406 = vmatprep.subr.bf16.mxu0 0
    %407 = vmatpush2.bf16.xpose.msra.mxu0 0
    %408 = vmatprep.subr.bf16.mxu0 0
    %409 = vmatpush2.bf16.xpose.msra.mxu0 0
    %410 = vmatprep.subr.bf16.mxu0 0
    %411 = vmatpush2.bf16.xpose.msra.mxu0 0
    %412 = vmatprep.subr.bf16.mxu0 0
    %413 = vmatpush2.bf16.xpose.msra.mxu0 0
    %414 = vmatprep.subr.bf16.mxu0 0
    %415 = vmatpush2.bf16.xpose.msra.mxu0 0
    %416 = vmatprep.subr.bf16.mxu0 0
    %417 = vmatpush2.bf16.xpose.msra.mxu0 0
    %418 = vmatprep.subr.bf16.mxu0 0
    %419 = vmatpush2.bf16.xpose.msra.mxu0 0
    %420 = vmatprep.mubr.bf16.mxu0 0
    %421 = vmatmul.mubr.bf16.gmra.mxu0 %v383
    %v422 = vpop.f32.mrf.mxu0
    %v423 = vadd.f32 0.0, %v422
    %v424 = vpop.f32.mrf.mxu0
    %v425 = vpop.f32.mrf.mxu0
    %v426 = vpop.f32.mrf.mxu0
    %427 = vdwg.mxu0
    %v428 = vmul.f32 %v377, 0.35355338
    %v429 = vmul.f32 %v423, 0.35355338
    %v430 = vsel %vm335, %v428, -inf
    %431 = vmax.xlane.f32.xlu0 %v430
    %v432 = vpop.xlane.xlu0 %431
    %v433 = vsel %vm335, %v429, -inf
    %434 = vmax.xlane.f32.xlu0 %v433
    %v435 = vpop.xlane.xlu0 %434
    %v436 = vsub.f32 %v428, %v432
    %v437 = vsub.f32 %v429, %v435
    %v438 = vmul.f32 %v436, 1.442695
    %v439 = vpow.pop %v438
    %v440 = vmul.f32 %v437, 1.442695
    %v441 = vpow.pop %v440
    %v442 = vsel %vm333, 1, 0
    %v443 = vsel %vm334, 1, 0
    %v444 = vlaneseq
    %v445 = vshrl.u32 %v444, 7
    %v446 = vsub.s32 0, %v445
    %v447 = vrot.slane %v442, %v446
    %v448 = vlaneseq
    %v449 = vshrl.u32 %v448, 7
    %v450 = vsub.s32 0, %v449
    %v451 = vrot.slane %v443, %v450
    %vm452 = vcmp.eq.s32.totalorder %v447, 1
    %vm453 = vcmp.eq.s32.totalorder %v451, 1
    %v454 = vsel %vm452, -1e+09, %v439
    %v455 = vsel %vm453, -1e+09, %v441
    %v456 = vsel %vm335, %v454, -inf
    %457 = vmax.xlane.f32.xlu0 %v456
    %v458 = vpop.xlane.xlu0 %457
    %v459 = vsel %vm335, %v455, -inf
    %460 = vmax.xlane.f32.xlu0 %v459
    %v461 = vpop.xlane.xlu0 %460
    %v462 = vsub.f32 %v454, %v458
    %v463 = vsub.f32 %v455, %v461
    %v464 = vmul.f32 %v462, 1.442695
    %v465 = vpow.pop %v464
    %v466 = vmul.f32 %v463, 1.442695
    %v467 = vpow.pop %v466
    %v468 = vsel %vm335, %v465, 0.0
    %469 = vadd.xlane.f32.xlu0 %v468
    %v470 = vpop.xlane.xlu0 %469
    %v471 = vsel %vm335, %v467, 0.0
    %472 = vadd.xlane.f32.xlu0 %v471
    %v473 = vpop.xlane.xlu0 %472
    %v474 = vrcp.pop %v470
    %v475 = vmul.f32 %v465, %v474
    %v476 = vrcp.pop %v473
    %v477 = vmul.f32 %v467, %v476
    %v478 = vpack.c.bf16 %v475, %v475
    %v479 = vpack.c.bf16 %v477, %v477
    %v481 = vsel %vm335, %v478, 0
    %vm483 = vcmask 1043456
    %v485 = vsel %vm483, %v323, 0
    %487 = vmatprep.subr.bf16.mxu0 0
    %488 = vmatpush1.bf16.msra.mxu0 0
    %489 = vmatprep.subr.bf16.mxu0 0
    %490 = vmatpush1.bf16.msra.mxu0 0
    %491 = vmatprep.subr.bf16.mxu0 0
    %492 = vmatpush1.bf16.msra.mxu0 0
    %493 = vmatprep.subr.bf16.mxu0 0
    %494 = vmatpush1.bf16.msra.mxu0 0
    %495 = vmatprep.subr.bf16.mxu0 0
    %496 = vmatpush1.bf16.msra.mxu0 0
    %497 = vmatprep.subr.bf16.mxu0 0
    %498 = vmatpush1.bf16.msra.mxu0 0
    %499 = vmatprep.subr.bf16.mxu0 0
    %500 = vmatpush1.bf16.msra.mxu0 0
    %501 = vmatprep.subr.bf16.mxu0 0
    %502 = vmatpush1.bf16.msra.mxu0 %v485
    %503 = vmatprep.subr.bf16.mxu0 0
    %504 = vmatpush2.bf16.msra.mxu0 0
    %505 = vmatprep.subr.bf16.mxu0 0
    %506 = vmatpush2.bf16.msra.mxu0 0
    %507 = vmatprep.subr.bf16.mxu0 0
    %508 = vmatpush2.bf16.msra.mxu0 0
    %509 = vmatprep.subr.bf16.mxu0 0
    %510 = vmatpush2.bf16.msra.mxu0 0
    %511 = vmatprep.subr.bf16.mxu0 0
    %512 = vmatpush2.bf16.msra.mxu0 0
    %513 = vmatprep.subr.bf16.mxu0 0
    %514 = vmatpush2.bf16.msra.mxu0 0
    %515 = vmatprep.subr.bf16.mxu0 0
    %516 = vmatpush2.bf16.msra.mxu0 0
    %517 = vmatprep.subr.bf16.mxu0 0
    %518 = vmatpush2.bf16.msra.mxu0 0
    %519 = vmatprep.mubr.bf16.mxu0 0
    %520 = vmatmul.mubr.bf16.gmra.mxu0 %v481
    %v521 = vpop.f32.mrf.mxu0
    %v522 = vadd.f32 0.0, %v521
    %v523 = vpop.f32.mrf.mxu0
    %v524 = vpop.f32.mrf.mxu0
    %v525 = vpop.f32.mrf.mxu0
    %526 = vdwg.mxu0
    %v528 = vsel %vm335, %v479, 0
    %v531 = vsel %vm483, %v324, 0
    %533 = vmatprep.subr.bf16.mxu0 0
    %534 = vmatpush1.bf16.msra.mxu0 0
    %535 = vmatprep.subr.bf16.mxu0 0
    %536 = vmatpush1.bf16.msra.mxu0 0
    %537 = vmatprep.subr.bf16.mxu0 0
    %538 = vmatpush1.bf16.msra.mxu0 0
    %539 = vmatprep.subr.bf16.mxu0 0
    %540 = vmatpush1.bf16.msra.mxu0 0
    %541 = vmatprep.subr.bf16.mxu0 0
    %542 = vmatpush1.bf16.msra.mxu0 0
    %543 = vmatprep.subr.bf16.mxu0 0
    %544 = vmatpush1.bf16.msra.mxu0 0
    %545 = vmatprep.subr.bf16.mxu0 0
    %546 = vmatpush1.bf16.msra.mxu0 0
    %547 = vmatprep.subr.bf16.mxu0 0
    %548 = vmatpush1.bf16.msra.mxu0 %v531
    %549 = vmatprep.subr.bf16.mxu0 0
    %550 = vmatpush2.bf16.msra.mxu0 0
    %551 = vmatprep.subr.bf16.mxu0 0
    %552 = vmatpush2.bf16.msra.mxu0 0
    %553 = vmatprep.subr.bf16.mxu0 0
    %554 = vmatpush2.bf16.msra.mxu0 0
    %555 = vmatprep.subr.bf16.mxu0 0
    %556 = vmatpush2.bf16.msra.mxu0 0
    %557 = vmatprep.subr.bf16.mxu0 0
    %558 = vmatpush2.bf16.msra.mxu0 0
    %559 = vmatprep.subr.bf16.mxu0 0
    %560 = vmatpush2.bf16.msra.mxu0 0
    %561 = vmatprep.subr.bf16.mxu0 0
    %562 = vmatpush2.bf16.msra.mxu0 0
    %563 = vmatprep.subr.bf16.mxu0 0
    %564 = vmatpush2.bf16.msra.mxu0 0
    %565 = vmatprep.mubr.bf16.mxu0 0
    %566 = vmatmul.mubr.bf16.gmra.mxu0 %v528
    %v567 = vpop.f32.mrf.mxu0
    %v568 = vadd.f32 0.0, %v567
    %v569 = vpop.f32.mrf.mxu0
    %v570 = vpop.f32.mrf.mxu0
    %v571 = vpop.f32.mrf.mxu0
    %572 = vdwg.mxu0
    %v573 = vpack.c.bf16 %v568, %v522
    %575 = vrot.lane.b32.xlu0 %v319, 120
    %v576 = vpop.permute.xlu0 %575
    %578 = vrot.lane.b32.xlu0 %v321, 120
    %v579 = vpop.permute.xlu0 %578
    %v581 = vsel %vm335, %v576, 0
    %v584 = vsel %vm335, %v579, 0
    %586 = vmatprep.subr.bf16.mxu0 0
    %587 = vmatpush1.bf16.xpose.msra.mxu0 0
    %588 = vmatprep.subr.bf16.mxu0 0
    %589 = vmatpush1.bf16.xpose.msra.mxu0 0
    %590 = vmatprep.subr.bf16.mxu0 0
    %591 = vmatpush1.bf16.xpose.msra.mxu0 0
    %592 = vmatprep.subr.bf16.mxu0 0
    %593 = vmatpush1.bf16.xpose.msra.mxu0 0
    %594 = vmatprep.subr.bf16.mxu0 0
    %595 = vmatpush1.bf16.xpose.msra.mxu0 0
    %596 = vmatprep.subr.bf16.mxu0 0
    %597 = vmatpush1.bf16.xpose.msra.mxu0 0
    %598 = vmatprep.subr.bf16.mxu0 0
    %599 = vmatpush1.bf16.xpose.msra.mxu0 0
    %600 = vmatprep.subr.bf16.mxu0 0
    %601 = vmatpush1.bf16.xpose.msra.mxu0 %v584
    %602 = vmatprep.subr.bf16.mxu0 0
    %603 = vmatpush2.bf16.xpose.msra.mxu0 0
    %604 = vmatprep.subr.bf16.mxu0 0
    %605 = vmatpush2.bf16.xpose.msra.mxu0 0
    %606 = vmatprep.subr.bf16.mxu0 0
    %607 = vmatpush2.bf16.xpose.msra.mxu0 0
    %608 = vmatprep.subr.bf16.mxu0 0
    %609 = vmatpush2.bf16.xpose.msra.mxu0 0
    %610 = vmatprep.subr.bf16.mxu0 0
    %611 = vmatpush2.bf16.xpose.msra.mxu0 0
    %612 = vmatprep.subr.bf16.mxu0 0
    %613 = vmatpush2.bf16.xpose.msra.mxu0 0
    %614 = vmatprep.subr.bf16.mxu0 0
    %615 = vmatpush2.bf16.xpose.msra.mxu0 0
    %616 = vmatprep.subr.bf16.mxu0 0
    %617 = vmatpush2.bf16.xpose.msra.mxu0 0
    %618 = vmatprep.mubr.bf16.mxu0 0
    %619 = vmatmul.mubr.bf16.gmra.mxu0 %v581
    %v620 = vpop.f32.mrf.mxu0
    %v621 = vadd.f32 0.0, %v620
    %v622 = vpop.f32.mrf.mxu0
    %v623 = vpop.f32.mrf.mxu0
    %v624 = vpop.f32.mrf.mxu0
    %625 = vdwg.mxu0
    %627 = vrot.lane.b32.xlu0 %v320, 120
    %v628 = vpop.permute.xlu0 %627
    %630 = vrot.lane.b32.xlu0 %v322, 120
    %v631 = vpop.permute.xlu0 %630
    %v633 = vsel %vm335, %v628, 0
    %v636 = vsel %vm335, %v631, 0
    %638 = vmatprep.subr.bf16.mxu0 0
    %639 = vmatpush1.bf16.xpose.msra.mxu0 0
    %640 = vmatprep.subr.bf16.mxu0 0
    %641 = vmatpush1.bf16.xpose.msra.mxu0 0
    %642 = vmatprep.subr.bf16.mxu0 0
    %643 = vmatpush1.bf16.xpose.msra.mxu0 0
    %644 = vmatprep.subr.bf16.mxu0 0
    %645 = vmatpush1.bf16.xpose.msra.mxu0 0
    %646 = vmatprep.subr.bf16.mxu0 0
    %647 = vmatpush1.bf16.xpose.msra.mxu0 0
    %648 = vmatprep.subr.bf16.mxu0 0
    %649 = vmatpush1.bf16.xpose.msra.mxu0 0
    %650 = vmatprep.subr.bf16.mxu0 0
    %651 = vmatpush1.bf16.xpose.msra.mxu0 0
    %652 = vmatprep.subr.bf16.mxu0 0
    %653 = vmatpush1.bf16.xpose.msra.mxu0 %v636
    %654 = vmatprep.subr.bf16.mxu0 0
    %655 = vmatpush2.bf16.xpose.msra.mxu0 0
    %656 = vmatprep.subr.bf16.mxu0 0
    %657 = vmatpush2.bf16.xpose.msra.mxu0 0
    %658 = vmatprep.subr.bf16.mxu0 0
    %659 = vmatpush2.bf16.xpose.msra.mxu0 0
    %660 = vmatprep.subr.bf16.mxu0 0
    %661 = vmatpush2.bf16.xpose.msra.mxu0 0
    %662 = vmatprep.subr.bf16.mxu0 0
    %663 = vmatpush2.bf16.xpose.msra.mxu0 0
    %664 = vmatprep.subr.bf16.mxu0 0
    %665 = vmatpush2.bf16.xpose.msra.mxu0 0
    %666 = vmatprep.subr.bf16.mxu0 0
    %667 = vmatpush2.bf16.xpose.msra.mxu0 0
    %668 = vmatprep.subr.bf16.mxu0 0
    %669 = vmatpush2.bf16.xpose.msra.mxu0 0
    %670 = vmatprep.mubr.bf16.mxu0 0
    %671 = vmatmul.mubr.bf16.gmra.mxu0 %v633
    %v672 = vpop.f32.mrf.mxu0
    %v673 = vadd.f32 0.0, %v672
    %v674 = vpop.f32.mrf.mxu0
    %v675 = vpop.f32.mrf.mxu0
    %v676 = vpop.f32.mrf.mxu0
    %677 = vdwg.mxu0
    %v678 = vmul.f32 %v621, 0.35355338
    %v679 = vmul.f32 %v673, 0.35355338
    %v680 = vsel %vm335, %v678, -inf
    %681 = vmax.xlane.f32.xlu0 %v680
    %v682 = vpop.xlane.xlu0 %681
    %v683 = vsel %vm335, %v679, -inf
    %684 = vmax.xlane.f32.xlu0 %v683
    %v685 = vpop.xlane.xlu0 %684
    %v686 = vsub.f32 %v678, %v682
    %v687 = vsub.f32 %v679, %v685
    %v688 = vmul.f32 %v686, 1.442695
    %v689 = vpow.pop %v688
    %v690 = vmul.f32 %v687, 1.442695
    %v691 = vpow.pop %v690
    %v692 = vsel %vm452, -1e+09, %v689
    %v693 = vsel %vm453, -1e+09, %v691
    %v694 = vsel %vm335, %v692, -inf
    %695 = vmax.xlane.f32.xlu0 %v694
    %v696 = vpop.xlane.xlu0 %695
    %v697 = vsel %vm335, %v693, -inf
    %698 = vmax.xlane.f32.xlu0 %v697
    %v699 = vpop.xlane.xlu0 %698
    %v700 = vsub.f32 %v692, %v696
    %v701 = vsub.f32 %v693, %v699
    %v702 = vmul.f32 %v700, 1.442695
    %v703 = vpow.pop %v702
    %v704 = vmul.f32 %v701, 1.442695
    %v705 = vpow.pop %v704
    %v706 = vsel %vm335, %v703, 0.0
    %707 = vadd.xlane.f32.xlu0 %v706
    %v708 = vpop.xlane.xlu0 %707
    %v709 = vsel %vm335, %v705, 0.0
    %710 = vadd.xlane.f32.xlu0 %v709
    %v711 = vpop.xlane.xlu0 %710
    %v712 = vrcp.pop %v708
    %v713 = vmul.f32 %v703, %v712
    %v714 = vrcp.pop %v711
    %v715 = vmul.f32 %v705, %v714
    %v716 = vpack.c.bf16 %v713, %v713
    %v717 = vpack.c.bf16 %v715, %v715
    %719 = vrot.lane.b32.xlu0 %v323, 120
    %v720 = vpop.permute.xlu0 %719
    %v722 = vsel %vm335, %v716, 0
    %v725 = vsel %vm483, %v720, 0
    %727 = vmatprep.subr.bf16.mxu0 0
    %728 = vmatpush1.bf16.msra.mxu0 0
    %729 = vmatprep.subr.bf16.mxu0 0
    %730 = vmatpush1.bf16.msra.mxu0 0
    %731 = vmatprep.subr.bf16.mxu0 0
    %732 = vmatpush1.bf16.msra.mxu0 0
    %733 = vmatprep.subr.bf16.mxu0 0
    %734 = vmatpush1.bf16.msra.mxu0 0
    %735 = vmatprep.subr.bf16.mxu0 0
    %736 = vmatpush1.bf16.msra.mxu0 0
    %737 = vmatprep.subr.bf16.mxu0 0
    %738 = vmatpush1.bf16.msra.mxu0 0
    %739 = vmatprep.subr.bf16.mxu0 0
    %740 = vmatpush1.bf16.msra.mxu0 0
    %741 = vmatprep.subr.bf16.mxu0 0
    %742 = vmatpush1.bf16.msra.mxu0 %v725
    %743 = vmatprep.subr.bf16.mxu0 0
    %744 = vmatpush2.bf16.msra.mxu0 0
    %745 = vmatprep.subr.bf16.mxu0 0
    %746 = vmatpush2.bf16.msra.mxu0 0
    %747 = vmatprep.subr.bf16.mxu0 0
    %748 = vmatpush2.bf16.msra.mxu0 0
    %749 = vmatprep.subr.bf16.mxu0 0
    %750 = vmatpush2.bf16.msra.mxu0 0
    %751 = vmatprep.subr.bf16.mxu0 0
    %752 = vmatpush2.bf16.msra.mxu0 0
    %753 = vmatprep.subr.bf16.mxu0 0
    %754 = vmatpush2.bf16.msra.mxu0 0
    %755 = vmatprep.subr.bf16.mxu0 0
    %756 = vmatpush2.bf16.msra.mxu0 0
    %757 = vmatprep.subr.bf16.mxu0 0
    %758 = vmatpush2.bf16.msra.mxu0 0
    %759 = vmatprep.mubr.bf16.mxu0 0
    %760 = vmatmul.mubr.bf16.gmra.mxu0 %v722
    %v761 = vpop.f32.mrf.mxu0
    %v762 = vadd.f32 0.0, %v761
    %v763 = vpop.f32.mrf.mxu0
    %v764 = vpop.f32.mrf.mxu0
    %v765 = vpop.f32.mrf.mxu0
    %766 = vdwg.mxu0
    %768 = vrot.lane.b32.xlu0 %v324, 120
    %v769 = vpop.permute.xlu0 %768
    %v771 = vsel %vm335, %v717, 0
    %v774 = vsel %vm483, %v769, 0
    %776 = vmatprep.subr.bf16.mxu0 0
    %777 = vmatpush1.bf16.msra.mxu0 0
    %778 = vmatprep.subr.bf16.mxu0 0
    %779 = vmatpush1.bf16.msra.mxu0 0
    %780 = vmatprep.subr.bf16.mxu0 0
    %781 = vmatpush1.bf16.msra.mxu0 0
    %782 = vmatprep.subr.bf16.mxu0 0
    %783 = vmatpush1.bf16.msra.mxu0 0
    %784 = vmatprep.subr.bf16.mxu0 0
    %785 = vmatpush1.bf16.msra.mxu0 0
    %786 = vmatprep.subr.bf16.mxu0 0
    %787 = vmatpush1.bf16.msra.mxu0 0
    %788 = vmatprep.subr.bf16.mxu0 0
    %789 = vmatpush1.bf16.msra.mxu0 0
    %790 = vmatprep.subr.bf16.mxu0 0
    %791 = vmatpush1.bf16.msra.mxu0 %v774
    %792 = vmatprep.subr.bf16.mxu0 0
    %793 = vmatpush2.bf16.msra.mxu0 0
    %794 = vmatprep.subr.bf16.mxu0 0
    %795 = vmatpush2.bf16.msra.mxu0 0
    %796 = vmatprep.subr.bf16.mxu0 0
    %797 = vmatpush2.bf16.msra.mxu0 0
    %798 = vmatprep.subr.bf16.mxu0 0
    %799 = vmatpush2.bf16.msra.mxu0 0
    %800 = vmatprep.subr.bf16.mxu0 0
    %801 = vmatpush2.bf16.msra.mxu0 0
    %802 = vmatprep.subr.bf16.mxu0 0
    %803 = vmatpush2.bf16.msra.mxu0 0
    %804 = vmatprep.subr.bf16.mxu0 0
    %805 = vmatpush2.bf16.msra.mxu0 0
    %806 = vmatprep.subr.bf16.mxu0 0
    %807 = vmatpush2.bf16.msra.mxu0 0
    %808 = vmatprep.mubr.bf16.mxu0 0
    %809 = vmatmul.mubr.bf16.gmra.mxu0 %v771
    %v810 = vpop.f32.mrf.mxu0
    %v811 = vadd.f32 0.0, %v810
    %v812 = vpop.f32.mrf.mxu0
    %v813 = vpop.f32.mrf.mxu0
    %v814 = vpop.f32.mrf.mxu0
    %815 = vdwg.mxu0
    %v816 = vpack.c.bf16 %v811, %v762
    %v818 = vrot.slane %v329, 4
    %v820 = vsel %vm335, %v816, 0
    %v823 = vsel %vm483, %v818, 0
    %825 = vmatprep.subr.bf16.mxu0 0
    %826 = vmatpush1.bf16.msra.mxu0 0
    %827 = vmatprep.subr.bf16.mxu0 0
    %828 = vmatpush1.bf16.msra.mxu0 0
    %829 = vmatprep.subr.bf16.mxu0 0
    %830 = vmatpush1.bf16.msra.mxu0 0
    %831 = vmatprep.subr.bf16.mxu0 0
    %832 = vmatpush1.bf16.msra.mxu0 0
    %833 = vmatprep.subr.bf16.mxu0 0
    %834 = vmatpush1.bf16.msra.mxu0 0
    %835 = vmatprep.subr.bf16.mxu0 0
    %836 = vmatpush1.bf16.msra.mxu0 0
    %837 = vmatprep.subr.bf16.mxu0 0
    %838 = vmatpush1.bf16.msra.mxu0 0
    %839 = vmatprep.subr.bf16.mxu0 0
    %840 = vmatpush1.bf16.msra.mxu0 %v823
    %841 = vmatprep.subr.bf16.mxu0 0
    %842 = vmatpush2.bf16.msra.mxu0 0
    %843 = vmatprep.subr.bf16.mxu0 0
    %844 = vmatpush2.bf16.msra.mxu0 0
    %845 = vmatprep.subr.bf16.mxu0 0
    %846 = vmatpush2.bf16.msra.mxu0 0
    %847 = vmatprep.subr.bf16.mxu0 0
    %848 = vmatpush2.bf16.msra.mxu0 0
    %849 = vmatprep.subr.bf16.mxu0 0
    %850 = vmatpush2.bf16.msra.mxu0 0
    %851 = vmatprep.subr.bf16.mxu0 0
    %852 = vmatpush2.bf16.msra.mxu0 0
    %853 = vmatprep.subr.bf16.mxu0 0
    %854 = vmatpush2.bf16.msra.mxu0 0
    %855 = vmatprep.subr.bf16.mxu0 0
    %856 = vmatpush2.bf16.msra.mxu0 0
    %857 = vmatprep.mubr.bf16.mxu0 0
    %858 = vmatmul.mubr.bf16.gmra.mxu0 %v820
    %v859 = vpop.f32.mrf.mxu0
    %v860 = vadd.f32 0.0, %v859
    %v861 = vpop.f32.mrf.mxu0
    %v862 = vpop.f32.mrf.mxu0
    %v863 = vadd.f32 0.0, %v862
    %v864 = vpop.f32.mrf.mxu0
    %865 = vdwg.mxu0
    %v867 = vsel %vm335, %v573, 0
    %v870 = vsel %vm483, %v329, 0
    %872 = vmatprep.subr.bf16.mxu0 0
    %873 = vmatpush1.bf16.msra.mxu0 0
    %874 = vmatprep.subr.bf16.mxu0 0
    %875 = vmatpush1.bf16.msra.mxu0 0
    %876 = vmatprep.subr.bf16.mxu0 0
    %877 = vmatpush1.bf16.msra.mxu0 0
    %878 = vmatprep.subr.bf16.mxu0 0
    %879 = vmatpush1.bf16.msra.mxu0 0
    %880 = vmatprep.subr.bf16.mxu0 0
    %881 = vmatpush1.bf16.msra.mxu0 0
    %882 = vmatprep.subr.bf16.mxu0 0
    %883 = vmatpush1.bf16.msra.mxu0 0
    %884 = vmatprep.subr.bf16.mxu0 0
    %885 = vmatpush1.bf16.msra.mxu0 0
    %886 = vmatprep.subr.bf16.mxu0 0
    %887 = vmatpush1.bf16.msra.mxu0 %v870
    %888 = vmatprep.subr.bf16.mxu0 0
    %889 = vmatpush2.bf16.msra.mxu0 0
    %890 = vmatprep.subr.bf16.mxu0 0
    %891 = vmatpush2.bf16.msra.mxu0 0
    %892 = vmatprep.subr.bf16.mxu0 0
    %893 = vmatpush2.bf16.msra.mxu0 0
    %894 = vmatprep.subr.bf16.mxu0 0
    %895 = vmatpush2.bf16.msra.mxu0 0
    %896 = vmatprep.subr.bf16.mxu0 0
    %897 = vmatpush2.bf16.msra.mxu0 0
    %898 = vmatprep.subr.bf16.mxu0 0
    %899 = vmatpush2.bf16.msra.mxu0 0
    %900 = vmatprep.subr.bf16.mxu0 0
    %901 = vmatpush2.bf16.msra.mxu0 0
    %902 = vmatprep.subr.bf16.mxu0 0
    %903 = vmatpush2.bf16.msra.mxu0 0
    %904 = vmatprep.mubr.bf16.mxu0 0
    %905 = vmatmul.mubr.bf16.gmra.mxu0 %v867
    %v906 = vpop.f32.mrf.mxu0
    %v907 = vadd.f32 %v860, %v906
    %v908 = vpop.f32.mrf.mxu0
    %v909 = vpop.f32.mrf.mxu0
    %v910 = vadd.f32 %v863, %v909
    %v911 = vpop.f32.mrf.mxu0
    %912 = vdwg.mxu0
    %913 = vrot.lane.b32.xlu0 %v319, 112
    %v914 = vpop.permute.xlu0 %913
    %915 = vrot.lane.b32.xlu0 %v321, 112
    %v916 = vpop.permute.xlu0 %915
    %v918 = vsel %vm335, %v914, 0
    %v921 = vsel %vm335, %v916, 0
    %923 = vmatprep.subr.bf16.mxu0 0
    %924 = vmatpush1.bf16.xpose.msra.mxu0 0
    %925 = vmatprep.subr.bf16.mxu0 0
    %926 = vmatpush1.bf16.xpose.msra.mxu0 0
    %927 = vmatprep.subr.bf16.mxu0 0
    %928 = vmatpush1.bf16.xpose.msra.mxu0 0
    %929 = vmatprep.subr.bf16.mxu0 0
    %930 = vmatpush1.bf16.xpose.msra.mxu0 0
    %931 = vmatprep.subr.bf16.mxu0 0
    %932 = vmatpush1.bf16.xpose.msra.mxu0 0
    %933 = vmatprep.subr.bf16.mxu0 0
    %934 = vmatpush1.bf16.xpose.msra.mxu0 0
    %935 = vmatprep.subr.bf16.mxu0 0
    %936 = vmatpush1.bf16.xpose.msra.mxu0 0
    %937 = vmatprep.subr.bf16.mxu0 0
    %938 = vmatpush1.bf16.xpose.msra.mxu0 %v921
    %939 = vmatprep.subr.bf16.mxu0 0
    %940 = vmatpush2.bf16.xpose.msra.mxu0 0
    %941 = vmatprep.subr.bf16.mxu0 0
    %942 = vmatpush2.bf16.xpose.msra.mxu0 0
    %943 = vmatprep.subr.bf16.mxu0 0
    %944 = vmatpush2.bf16.xpose.msra.mxu0 0
    %945 = vmatprep.subr.bf16.mxu0 0
    %946 = vmatpush2.bf16.xpose.msra.mxu0 0
    %947 = vmatprep.subr.bf16.mxu0 0
    %948 = vmatpush2.bf16.xpose.msra.mxu0 0
    %949 = vmatprep.subr.bf16.mxu0 0
    %950 = vmatpush2.bf16.xpose.msra.mxu0 0
    %951 = vmatprep.subr.bf16.mxu0 0
    %952 = vmatpush2.bf16.xpose.msra.mxu0 0
    %953 = vmatprep.subr.bf16.mxu0 0
    %954 = vmatpush2.bf16.xpose.msra.mxu0 0
    %955 = vmatprep.mubr.bf16.mxu0 0
    %956 = vmatmul.mubr.bf16.gmra.mxu0 %v918
    %v957 = vpop.f32.mrf.mxu0
    %v958 = vadd.f32 0.0, %v957
    %v959 = vpop.f32.mrf.mxu0
    %v960 = vpop.f32.mrf.mxu0
    %v961 = vpop.f32.mrf.mxu0
    %962 = vdwg.mxu0
    %963 = vrot.lane.b32.xlu0 %v320, 112
    %v964 = vpop.permute.xlu0 %963
    %965 = vrot.lane.b32.xlu0 %v322, 112
    %v966 = vpop.permute.xlu0 %965
    %v968 = vsel %vm335, %v964, 0
    %v971 = vsel %vm335, %v966, 0
    %973 = vmatprep.subr.bf16.mxu0 0
    %974 = vmatpush1.bf16.xpose.msra.mxu0 0
    %975 = vmatprep.subr.bf16.mxu0 0
    %976 = vmatpush1.bf16.xpose.msra.mxu0 0
    %977 = vmatprep.subr.bf16.mxu0 0
    %978 = vmatpush1.bf16.xpose.msra.mxu0 0
    %979 = vmatprep.subr.bf16.mxu0 0
    %980 = vmatpush1.bf16.xpose.msra.mxu0 0
    %981 = vmatprep.subr.bf16.mxu0 0
    %982 = vmatpush1.bf16.xpose.msra.mxu0 0
    %983 = vmatprep.subr.bf16.mxu0 0
    %984 = vmatpush1.bf16.xpose.msra.mxu0 0
    %985 = vmatprep.subr.bf16.mxu0 0
    %986 = vmatpush1.bf16.xpose.msra.mxu0 0
    %987 = vmatprep.subr.bf16.mxu0 0
    %988 = vmatpush1.bf16.xpose.msra.mxu0 %v971
    %989 = vmatprep.subr.bf16.mxu0 0
    %990 = vmatpush2.bf16.xpose.msra.mxu0 0
    %991 = vmatprep.subr.bf16.mxu0 0
    %992 = vmatpush2.bf16.xpose.msra.mxu0 0
    %993 = vmatprep.subr.bf16.mxu0 0
    %994 = vmatpush2.bf16.xpose.msra.mxu0 0
    %995 = vmatprep.subr.bf16.mxu0 0
    %996 = vmatpush2.bf16.xpose.msra.mxu0 0
    %997 = vmatprep.subr.bf16.mxu0 0
    %998 = vmatpush2.bf16.xpose.msra.mxu0 0
    %999 = vmatprep.subr.bf16.mxu0 0
    %1000 = vmatpush2.bf16.xpose.msra.mxu0 0
    %1001 = vmatprep.subr.bf16.mxu0 0
    %1002 = vmatpush2.bf16.xpose.msra.mxu0 0
    %1003 = vmatprep.subr.bf16.mxu0 0
    %1004 = vmatpush2.bf16.xpose.msra.mxu0 0
    %1005 = vmatprep.mubr.bf16.mxu0 0
    %1006 = vmatmul.mubr.bf16.gmra.mxu0 %v968
    %v1007 = vpop.f32.mrf.mxu0
    %v1008 = vadd.f32 0.0, %v1007
    %v1009 = vpop.f32.mrf.mxu0
    %v1010 = vpop.f32.mrf.mxu0
    %v1011 = vpop.f32.mrf.mxu0
    %1012 = vdwg.mxu0
    %v1013 = vmul.f32 %v958, 0.35355338
    %v1014 = vmul.f32 %v1008, 0.35355338
    %v1015 = vsel %vm335, %v1013, -inf
    %1016 = vmax.xlane.f32.xlu0 %v1015
    %v1017 = vpop.xlane.xlu0 %1016
    %v1018 = vsel %vm335, %v1014, -inf
    %1019 = vmax.xlane.f32.xlu0 %v1018
    %v1020 = vpop.xlane.xlu0 %1019
    %v1021 = vsub.f32 %v1013, %v1017
    %v1022 = vsub.f32 %v1014, %v1020
    %v1023 = vmul.f32 %v1021, 1.442695
    %v1024 = vpow.pop %v1023
    %v1025 = vmul.f32 %v1022, 1.442695
    %v1026 = vpow.pop %v1025
    %v1027 = vsel %vm452, -1e+09, %v1024
    %v1028 = vsel %vm453, -1e+09, %v1026
    %v1029 = vsel %vm335, %v1027, -inf
    %1030 = vmax.xlane.f32.xlu0 %v1029
    %v1031 = vpop.xlane.xlu0 %1030
    %v1032 = vsel %vm335, %v1028, -inf
    %1033 = vmax.xlane.f32.xlu0 %v1032
    %v1034 = vpop.xlane.xlu0 %1033
    %v1035 = vsub.f32 %v1027, %v1031
    %v1036 = vsub.f32 %v1028, %v1034
    %v1037 = vmul.f32 %v1035, 1.442695
    %v1038 = vpow.pop %v1037
    %v1039 = vmul.f32 %v1036, 1.442695
    %v1040 = vpow.pop %v1039
    %v1041 = vsel %vm335, %v1038, 0.0
    %1042 = vadd.xlane.f32.xlu0 %v1041
    %v1043 = vpop.xlane.xlu0 %1042
    %v1044 = vsel %vm335, %v1040, 0.0
    %1045 = vadd.xlane.f32.xlu0 %v1044
    %v1046 = vpop.xlane.xlu0 %1045
    %v1047 = vrcp.pop %v1043
    %v1048 = vmul.f32 %v1038, %v1047
    %v1049 = vrcp.pop %v1046
    %v1050 = vmul.f32 %v1040, %v1049
    %v1051 = vpack.c.bf16 %v1048, %v1048
    %v1052 = vpack.c.bf16 %v1050, %v1050
    %1053 = vrot.lane.b32.xlu0 %v323, 112
    %v1054 = vpop.permute.xlu0 %1053
    %v1056 = vsel %vm335, %v1051, 0
    %v1059 = vsel %vm483, %v1054, 0
    %1061 = vmatprep.subr.bf16.mxu0 0
    %1062 = vmatpush1.bf16.msra.mxu0 0
    %1063 = vmatprep.subr.bf16.mxu0 0
    %1064 = vmatpush1.bf16.msra.mxu0 0
    %1065 = vmatprep.subr.bf16.mxu0 0
    %1066 = vmatpush1.bf16.msra.mxu0 0
    %1067 = vmatprep.subr.bf16.mxu0 0
    %1068 = vmatpush1.bf16.msra.mxu0 0
    %1069 = vmatprep.subr.bf16.mxu0 0
    %1070 = vmatpush1.bf16.msra.mxu0 0
    %1071 = vmatprep.subr.bf16.mxu0 0
    %1072 = vmatpush1.bf16.msra.mxu0 0
    %1073 = vmatprep.subr.bf16.mxu0 0
    %1074 = vmatpush1.bf16.msra.mxu0 0
    %1075 = vmatprep.subr.bf16.mxu0 0
    %1076 = vmatpush1.bf16.msra.mxu0 %v1059
    %1077 = vmatprep.subr.bf16.mxu0 0
    %1078 = vmatpush2.bf16.msra.mxu0 0
    %1079 = vmatprep.subr.bf16.mxu0 0
    %1080 = vmatpush2.bf16.msra.mxu0 0
    %1081 = vmatprep.subr.bf16.mxu0 0
    %1082 = vmatpush2.bf16.msra.mxu0 0
    %1083 = vmatprep.subr.bf16.mxu0 0
    %1084 = vmatpush2.bf16.msra.mxu0 0
    %1085 = vmatprep.subr.bf16.mxu0 0
    %1086 = vmatpush2.bf16.msra.mxu0 0
    %1087 = vmatprep.subr.bf16.mxu0 0
    %1088 = vmatpush2.bf16.msra.mxu0 0
    %1089 = vmatprep.subr.bf16.mxu0 0
    %1090 = vmatpush2.bf16.msra.mxu0 0
    %1091 = vmatprep.subr.bf16.mxu0 0
    %1092 = vmatpush2.bf16.msra.mxu0 0
    %1093 = vmatprep.mubr.bf16.mxu0 0
    %1094 = vmatmul.mubr.bf16.gmra.mxu0 %v1056
    %v1095 = vpop.f32.mrf.mxu0
    %v1096 = vadd.f32 0.0, %v1095
    %v1097 = vpop.f32.mrf.mxu0
    %v1098 = vpop.f32.mrf.mxu0
    %v1099 = vpop.f32.mrf.mxu0
    %1100 = vdwg.mxu0
    %1101 = vrot.lane.b32.xlu0 %v324, 112
    %v1102 = vpop.permute.xlu0 %1101
    %v1104 = vsel %vm335, %v1052, 0
    %v1107 = vsel %vm483, %v1102, 0
    %1109 = vmatprep.subr.bf16.mxu0 0
    %1110 = vmatpush1.bf16.msra.mxu0 0
    %1111 = vmatprep.subr.bf16.mxu0 0
    %1112 = vmatpush1.bf16.msra.mxu0 0
    %1113 = vmatprep.subr.bf16.mxu0 0
    %1114 = vmatpush1.bf16.msra.mxu0 0
    %1115 = vmatprep.subr.bf16.mxu0 0
    %1116 = vmatpush1.bf16.msra.mxu0 0
    %1117 = vmatprep.subr.bf16.mxu0 0
    %1118 = vmatpush1.bf16.msra.mxu0 0
    %1119 = vmatprep.subr.bf16.mxu0 0
    %1120 = vmatpush1.bf16.msra.mxu0 0
    %1121 = vmatprep.subr.bf16.mxu0 0
    %1122 = vmatpush1.bf16.msra.mxu0 0
    %1123 = vmatprep.subr.bf16.mxu0 0
    %1124 = vmatpush1.bf16.msra.mxu0 %v1107
    %1125 = vmatprep.subr.bf16.mxu0 0
    %1126 = vmatpush2.bf16.msra.mxu0 0
    %1127 = vmatprep.subr.bf16.mxu0 0
    %1128 = vmatpush2.bf16.msra.mxu0 0
    %1129 = vmatprep.subr.bf16.mxu0 0
    %1130 = vmatpush2.bf16.msra.mxu0 0
    %1131 = vmatprep.subr.bf16.mxu0 0
    %1132 = vmatpush2.bf16.msra.mxu0 0
    %1133 = vmatprep.subr.bf16.mxu0 0
    %1134 = vmatpush2.bf16.msra.mxu0 0
    %1135 = vmatprep.subr.bf16.mxu0 0
    %1136 = vmatpush2.bf16.msra.mxu0 0
    %1137 = vmatprep.subr.bf16.mxu0 0
    %1138 = vmatpush2.bf16.msra.mxu0 0
    %1139 = vmatprep.subr.bf16.mxu0 0
    %1140 = vmatpush2.bf16.msra.mxu0 0
    %1141 = vmatprep.mubr.bf16.mxu0 0
    %1142 = vmatmul.mubr.bf16.gmra.mxu0 %v1104
    %v1143 = vpop.f32.mrf.mxu0
    %v1144 = vadd.f32 0.0, %v1143
    %v1145 = vpop.f32.mrf.mxu0
    %v1146 = vpop.f32.mrf.mxu0
    %v1147 = vpop.f32.mrf.mxu0
    %1148 = vdwg.mxu0
    %v1149 = vpack.c.bf16 %v1144, %v1096
    %v1151 = vsel %vm335, %v1149, 0
    %v1154 = vsel %vm483, %v330, 0
    %1156 = vmatprep.subr.bf16.mxu0 0
    %1157 = vmatpush1.bf16.msra.mxu0 0
    %1158 = vmatprep.subr.bf16.mxu0 0
    %1159 = vmatpush1.bf16.msra.mxu0 0
    %1160 = vmatprep.subr.bf16.mxu0 0
    %1161 = vmatpush1.bf16.msra.mxu0 0
    %1162 = vmatprep.subr.bf16.mxu0 0
    %1163 = vmatpush1.bf16.msra.mxu0 0
    %1164 = vmatprep.subr.bf16.mxu0 0
    %1165 = vmatpush1.bf16.msra.mxu0 0
    %1166 = vmatprep.subr.bf16.mxu0 0
    %1167 = vmatpush1.bf16.msra.mxu0 0
    %1168 = vmatprep.subr.bf16.mxu0 0
    %1169 = vmatpush1.bf16.msra.mxu0 0
    %1170 = vmatprep.subr.bf16.mxu0 0
    %1171 = vmatpush1.bf16.msra.mxu0 %v1154
    %1172 = vmatprep.subr.bf16.mxu0 0
    %1173 = vmatpush2.bf16.msra.mxu0 0
    %1174 = vmatprep.subr.bf16.mxu0 0
    %1175 = vmatpush2.bf16.msra.mxu0 0
    %1176 = vmatprep.subr.bf16.mxu0 0
    %1177 = vmatpush2.bf16.msra.mxu0 0
    %1178 = vmatprep.subr.bf16.mxu0 0
    %1179 = vmatpush2.bf16.msra.mxu0 0
    %1180 = vmatprep.subr.bf16.mxu0 0
    %1181 = vmatpush2.bf16.msra.mxu0 0
    %1182 = vmatprep.subr.bf16.mxu0 0
    %1183 = vmatpush2.bf16.msra.mxu0 0
    %1184 = vmatprep.subr.bf16.mxu0 0
    %1185 = vmatpush2.bf16.msra.mxu0 0
    %1186 = vmatprep.subr.bf16.mxu0 0
    %1187 = vmatpush2.bf16.msra.mxu0 0
    %1188 = vmatprep.mubr.bf16.mxu0 0
    %1189 = vmatmul.mubr.bf16.gmra.mxu0 %v1151
    %v1190 = vpop.f32.mrf.mxu0
    %v1191 = vadd.f32 0.0, %v1190
    %v1192 = vpop.f32.mrf.mxu0
    %v1193 = vpop.f32.mrf.mxu0
    %v1194 = vadd.f32 0.0, %v1193
    %v1195 = vpop.f32.mrf.mxu0
    %1196 = vdwg.mxu0
    %v1197 = vadd.f32 %v907, %v1191
    %v1198 = vadd.f32 %v910, %v1194
    %1199 = vrot.lane.b32.xlu0 %v319, 104
    %v1200 = vpop.permute.xlu0 %1199
    %1201 = vrot.lane.b32.xlu0 %v321, 104
    %v1202 = vpop.permute.xlu0 %1201
    %v1204 = vsel %vm335, %v1200, 0
    %v1207 = vsel %vm335, %v1202, 0
    %1209 = vmatprep.subr.bf16.mxu0 0
    %1210 = vmatpush1.bf16.xpose.msra.mxu0 0
    %1211 = vmatprep.subr.bf16.mxu0 0
    %1212 = vmatpush1.bf16.xpose.msra.mxu0 0
    %1213 = vmatprep.subr.bf16.mxu0 0
    %1214 = vmatpush1.bf16.xpose.msra.mxu0 0
    %1215 = vmatprep.subr.bf16.mxu0 0
    %1216 = vmatpush1.bf16.xpose.msra.mxu0 0
    %1217 = vmatprep.subr.bf16.mxu0 0
    %1218 = vmatpush1.bf16.xpose.msra.mxu0 0
    %1219 = vmatprep.subr.bf16.mxu0 0
    %1220 = vmatpush1.bf16.xpose.msra.mxu0 0
    %1221 = vmatprep.subr.bf16.mxu0 0
    %1222 = vmatpush1.bf16.xpose.msra.mxu0 0
    %1223 = vmatprep.subr.bf16.mxu0 0
    %1224 = vmatpush1.bf16.xpose.msra.mxu0 %v1207
    %1225 = vmatprep.subr.bf16.mxu0 0
    %1226 = vmatpush2.bf16.xpose.msra.mxu0 0
    %1227 = vmatprep.subr.bf16.mxu0 0
    %1228 = vmatpush2.bf16.xpose.msra.mxu0 0
    %1229 = vmatprep.subr.bf16.mxu0 0
    %1230 = vmatpush2.bf16.xpose.msra.mxu0 0
    %1231 = vmatprep.subr.bf16.mxu0 0
    %1232 = vmatpush2.bf16.xpose.msra.mxu0 0
    %1233 = vmatprep.subr.bf16.mxu0 0
    %1234 = vmatpush2.bf16.xpose.msra.mxu0 0
    %1235 = vmatprep.subr.bf16.mxu0 0
    %1236 = vmatpush2.bf16.xpose.msra.mxu0 0
    %1237 = vmatprep.subr.bf16.mxu0 0
    %1238 = vmatpush2.bf16.xpose.msra.mxu0 0
    %1239 = vmatprep.subr.bf16.mxu0 0
    %1240 = vmatpush2.bf16.xpose.msra.mxu0 0
    %1241 = vmatprep.mubr.bf16.mxu0 0
    %1242 = vmatmul.mubr.bf16.gmra.mxu0 %v1204
    %v1243 = vpop.f32.mrf.mxu0
    %v1244 = vadd.f32 0.0, %v1243
    %v1245 = vpop.f32.mrf.mxu0
    %v1246 = vpop.f32.mrf.mxu0
    %v1247 = vpop.f32.mrf.mxu0
    %1248 = vdwg.mxu0
    %1249 = vrot.lane.b32.xlu0 %v320, 104
    %v1250 = vpop.permute.xlu0 %1249
    %1251 = vrot.lane.b32.xlu0 %v322, 104
    %v1252 = vpop.permute.xlu0 %1251
    %v1254 = vsel %vm335, %v1250, 0
    %v1257 = vsel %vm335, %v1252, 0
    %1259 = vmatprep.subr.bf16.mxu0 0
    %1260 = vmatpush1.bf16.xpose.msra.mxu0 0
    %1261 = vmatprep.subr.bf16.mxu0 0
    %1262 = vmatpush1.bf16.xpose.msra.mxu0 0
    %1263 = vmatprep.subr.bf16.mxu0 0
    %1264 = vmatpush1.bf16.xpose.msra.mxu0 0
    %1265 = vmatprep.subr.bf16.mxu0 0
    %1266 = vmatpush1.bf16.xpose.msra.mxu0 0
    %1267 = vmatprep.subr.bf16.mxu0 0
    %1268 = vmatpush1.bf16.xpose.msra.mxu0 0
    %1269 = vmatprep.subr.bf16.mxu0 0
    %1270 = vmatpush1.bf16.xpose.msra.mxu0 0
    %1271 = vmatprep.subr.bf16.mxu0 0
    %1272 = vmatpush1.bf16.xpose.msra.mxu0 0
    %1273 = vmatprep.subr.bf16.mxu0 0
    %1274 = vmatpush1.bf16.xpose.msra.mxu0 %v1257
    %1275 = vmatprep.subr.bf16.mxu0 0
    %1276 = vmatpush2.bf16.xpose.msra.mxu0 0
    %1277 = vmatprep.subr.bf16.mxu0 0
    %1278 = vmatpush2.bf16.xpose.msra.mxu0 0
    %1279 = vmatprep.subr.bf16.mxu0 0
    %1280 = vmatpush2.bf16.xpose.msra.mxu0 0
    %1281 = vmatprep.subr.bf16.mxu0 0
    %1282 = vmatpush2.bf16.xpose.msra.mxu0 0
    %1283 = vmatprep.subr.bf16.mxu0 0
    %1284 = vmatpush2.bf16.xpose.msra.mxu0 0
    %1285 = vmatprep.subr.bf16.mxu0 0
    %1286 = vmatpush2.bf16.xpose.msra.mxu0 0
    %1287 = vmatprep.subr.bf16.mxu0 0
    %1288 = vmatpush2.bf16.xpose.msra.mxu0 0
    %1289 = vmatprep.subr.bf16.mxu0 0
    %1290 = vmatpush2.bf16.xpose.msra.mxu0 0
    %1291 = vmatprep.mubr.bf16.mxu0 0
    %1292 = vmatmul.mubr.bf16.gmra.mxu0 %v1254
    %v1293 = vpop.f32.mrf.mxu0
    %v1294 = vadd.f32 0.0, %v1293
    %v1295 = vpop.f32.mrf.mxu0
    %v1296 = vpop.f32.mrf.mxu0
    %v1297 = vpop.f32.mrf.mxu0
    %1298 = vdwg.mxu0
    %v1299 = vmul.f32 %v1244, 0.35355338
    %v1300 = vmul.f32 %v1294, 0.35355338
    %v1301 = vsel %vm335, %v1299, -inf
    %1302 = vmax.xlane.f32.xlu0 %v1301
    %v1303 = vpop.xlane.xlu0 %1302
    %v1304 = vsel %vm335, %v1300, -inf
    %1305 = vmax.xlane.f32.xlu0 %v1304
    %v1306 = vpop.xlane.xlu0 %1305
    %v1307 = vsub.f32 %v1299, %v1303
    %v1308 = vsub.f32 %v1300, %v1306
    %v1309 = vmul.f32 %v1307, 1.442695
    %v1310 = vpow.pop %v1309
    %v1311 = vmul.f32 %v1308, 1.442695
    %v1312 = vpow.pop %v1311
    %v1313 = vsel %vm452, -1e+09, %v1310
    %v1314 = vsel %vm453, -1e+09, %v1312
    %v1315 = vsel %vm335, %v1313, -inf
    %1316 = vmax.xlane.f32.xlu0 %v1315
    %v1317 = vpop.xlane.xlu0 %1316
    %v1318 = vsel %vm335, %v1314, -inf
    %1319 = vmax.xlane.f32.xlu0 %v1318
    %v1320 = vpop.xlane.xlu0 %1319
    %v1321 = vsub.f32 %v1313, %v1317
    %v1322 = vsub.f32 %v1314, %v1320
    %v1323 = vmul.f32 %v1321, 1.442695
    %v1324 = vpow.pop %v1323
    %v1325 = vmul.f32 %v1322, 1.442695
    %v1326 = vpow.pop %v1325
    %v1327 = vsel %vm335, %v1324, 0.0
    %1328 = vadd.xlane.f32.xlu0 %v1327
    %v1329 = vpop.xlane.xlu0 %1328
    %v1330 = vsel %vm335, %v1326, 0.0
    %1331 = vadd.xlane.f32.xlu0 %v1330
    %v1332 = vpop.xlane.xlu0 %1331
    %v1333 = vrcp.pop %v1329
    %v1334 = vmul.f32 %v1324, %v1333
    %v1335 = vrcp.pop %v1332
    %v1336 = vmul.f32 %v1326, %v1335
    %v1337 = vpack.c.bf16 %v1334, %v1334
    %v1338 = vpack.c.bf16 %v1336, %v1336
    %1339 = vrot.lane.b32.xlu0 %v323, 104
    %v1340 = vpop.permute.xlu0 %1339
    %v1342 = vsel %vm335, %v1337, 0
    %v1345 = vsel %vm483, %v1340, 0
    %1347 = vmatprep.subr.bf16.mxu0 0
    %1348 = vmatpush1.bf16.msra.mxu0 0
    %1349 = vmatprep.subr.bf16.mxu0 0
    %1350 = vmatpush1.bf16.msra.mxu0 0
    %1351 = vmatprep.subr.bf16.mxu0 0
    %1352 = vmatpush1.bf16.msra.mxu0 0
    %1353 = vmatprep.subr.bf16.mxu0 0
    %1354 = vmatpush1.bf16.msra.mxu0 0
    %1355 = vmatprep.subr.bf16.mxu0 0
    %1356 = vmatpush1.bf16.msra.mxu0 0
    %1357 = vmatprep.subr.bf16.mxu0 0
    %1358 = vmatpush1.bf16.msra.mxu0 0
    %1359 = vmatprep.subr.bf16.mxu0 0
    %1360 = vmatpush1.bf16.msra.mxu0 0
    %1361 = vmatprep.subr.bf16.mxu0 0
    %1362 = vmatpush1.bf16.msra.mxu0 %v1345
    %1363 = vmatprep.subr.bf16.mxu0 0
    %1364 = vmatpush2.bf16.msra.mxu0 0
    %1365 = vmatprep.subr.bf16.mxu0 0
    %1366 = vmatpush2.bf16.msra.mxu0 0
    %1367 = vmatprep.subr.bf16.mxu0 0
    %1368 = vmatpush2.bf16.msra.mxu0 0
    %1369 = vmatprep.subr.bf16.mxu0 0
    %1370 = vmatpush2.bf16.msra.mxu0 0
    %1371 = vmatprep.subr.bf16.mxu0 0
    %1372 = vmatpush2.bf16.msra.mxu0 0
    %1373 = vmatprep.subr.bf16.mxu0 0
    %1374 = vmatpush2.bf16.msra.mxu0 0
    %1375 = vmatprep.subr.bf16.mxu0 0
    %1376 = vmatpush2.bf16.msra.mxu0 0
    %1377 = vmatprep.subr.bf16.mxu0 0
    %1378 = vmatpush2.bf16.msra.mxu0 0
    %1379 = vmatprep.mubr.bf16.mxu0 0
    %1380 = vmatmul.mubr.bf16.gmra.mxu0 %v1342
    %v1381 = vpop.f32.mrf.mxu0
    %v1382 = vadd.f32 0.0, %v1381
    %v1383 = vpop.f32.mrf.mxu0
    %v1384 = vpop.f32.mrf.mxu0
    %v1385 = vpop.f32.mrf.mxu0
    %1386 = vdwg.mxu0
    %1387 = vrot.lane.b32.xlu0 %v324, 104
    %v1388 = vpop.permute.xlu0 %1387
    %v1390 = vsel %vm335, %v1338, 0
    %v1393 = vsel %vm483, %v1388, 0
    %1395 = vmatprep.subr.bf16.mxu0 0
    %1396 = vmatpush1.bf16.msra.mxu0 0
    %1397 = vmatprep.subr.bf16.mxu0 0
    %1398 = vmatpush1.bf16.msra.mxu0 0
    %1399 = vmatprep.subr.bf16.mxu0 0
    %1400 = vmatpush1.bf16.msra.mxu0 0
    %1401 = vmatprep.subr.bf16.mxu0 0
    %1402 = vmatpush1.bf16.msra.mxu0 0
    %1403 = vmatprep.subr.bf16.mxu0 0
    %1404 = vmatpush1.bf16.msra.mxu0 0
    %1405 = vmatprep.subr.bf16.mxu0 0
    %1406 = vmatpush1.bf16.msra.mxu0 0
    %1407 = vmatprep.subr.bf16.mxu0 0
    %1408 = vmatpush1.bf16.msra.mxu0 0
    %1409 = vmatprep.subr.bf16.mxu0 0
    %1410 = vmatpush1.bf16.msra.mxu0 %v1393
    %1411 = vmatprep.subr.bf16.mxu0 0
    %1412 = vmatpush2.bf16.msra.mxu0 0
    %1413 = vmatprep.subr.bf16.mxu0 0
    %1414 = vmatpush2.bf16.msra.mxu0 0
    %1415 = vmatprep.subr.bf16.mxu0 0
    %1416 = vmatpush2.bf16.msra.mxu0 0
    %1417 = vmatprep.subr.bf16.mxu0 0
    %1418 = vmatpush2.bf16.msra.mxu0 0
    %1419 = vmatprep.subr.bf16.mxu0 0
    %1420 = vmatpush2.bf16.msra.mxu0 0
    %1421 = vmatprep.subr.bf16.mxu0 0
    %1422 = vmatpush2.bf16.msra.mxu0 0
    %1423 = vmatprep.subr.bf16.mxu0 0
    %1424 = vmatpush2.bf16.msra.mxu0 0
    %1425 = vmatprep.subr.bf16.mxu0 0
    %1426 = vmatpush2.bf16.msra.mxu0 0
    %1427 = vmatprep.mubr.bf16.mxu0 0
    %1428 = vmatmul.mubr.bf16.gmra.mxu0 %v1390
    %v1429 = vpop.f32.mrf.mxu0
    %v1430 = vadd.f32 0.0, %v1429
    %v1431 = vpop.f32.mrf.mxu0
    %v1432 = vpop.f32.mrf.mxu0
    %v1433 = vpop.f32.mrf.mxu0
    %1434 = vdwg.mxu0
    %v1435 = vpack.c.bf16 %v1430, %v1382
    %v1437 = vrot.slane %v330, 4
    %v1439 = vsel %vm335, %v1435, 0
    %v1442 = vsel %vm483, %v1437, 0
    %1444 = vmatprep.subr.bf16.mxu0 0
    %1445 = vmatpush1.bf16.msra.mxu0 0
    %1446 = vmatprep.subr.bf16.mxu0 0
    %1447 = vmatpush1.bf16.msra.mxu0 0
    %1448 = vmatprep.subr.bf16.mxu0 0
    %1449 = vmatpush1.bf16.msra.mxu0 0
    %1450 = vmatprep.subr.bf16.mxu0 0
    %1451 = vmatpush1.bf16.msra.mxu0 0
    %1452 = vmatprep.subr.bf16.mxu0 0
    %1453 = vmatpush1.bf16.msra.mxu0 0
    %1454 = vmatprep.subr.bf16.mxu0 0
    %1455 = vmatpush1.bf16.msra.mxu0 0
    %1456 = vmatprep.subr.bf16.mxu0 0
    %1457 = vmatpush1.bf16.msra.mxu0 0
    %1458 = vmatprep.subr.bf16.mxu0 0
    %1459 = vmatpush1.bf16.msra.mxu0 %v1442
    %1460 = vmatprep.subr.bf16.mxu0 0
    %1461 = vmatpush2.bf16.msra.mxu0 0
    %1462 = vmatprep.subr.bf16.mxu0 0
    %1463 = vmatpush2.bf16.msra.mxu0 0
    %1464 = vmatprep.subr.bf16.mxu0 0
    %1465 = vmatpush2.bf16.msra.mxu0 0
    %1466 = vmatprep.subr.bf16.mxu0 0
    %1467 = vmatpush2.bf16.msra.mxu0 0
    %1468 = vmatprep.subr.bf16.mxu0 0
    %1469 = vmatpush2.bf16.msra.mxu0 0
    %1470 = vmatprep.subr.bf16.mxu0 0
    %1471 = vmatpush2.bf16.msra.mxu0 0
    %1472 = vmatprep.subr.bf16.mxu0 0
    %1473 = vmatpush2.bf16.msra.mxu0 0
    %1474 = vmatprep.subr.bf16.mxu0 0
    %1475 = vmatpush2.bf16.msra.mxu0 0
    %1476 = vmatprep.mubr.bf16.mxu0 0
    %1477 = vmatmul.mubr.bf16.gmra.mxu0 %v1439
    %v1478 = vpop.f32.mrf.mxu0
    %v1479 = vadd.f32 0.0, %v1478
    %v1480 = vpop.f32.mrf.mxu0
    %v1481 = vpop.f32.mrf.mxu0
    %v1482 = vadd.f32 0.0, %v1481
    %v1483 = vpop.f32.mrf.mxu0
    %1484 = vdwg.mxu0
    %v1485 = vadd.f32 %v1197, %v1479
    %v1486 = vadd.f32 %v1198, %v1482
    %v1487 = vld [vmem:[%s11] sm:$0x1]
    %v1489 = vlaneseq
    %v1490 = vshrl.u32 %v1489, 7
    %v1491 = vsub.s32 0, %v1490
    %v1492 = vrot.slane %v1487, %v1491
    %v1494 = vadd.f32 %v1485, %v1492
    %v1495 = vadd.f32 %v1486, %v1492
    %1496 = vst.msk [vmem:[#allocation14] sm:$0xff] %vm158, %v1494
    %1497 = vst.msk [vmem:[#allocation14 + $0x8] sm:$0xff] %vm158, %v1495
    // Predicated region
    $region78: #{tpu_custom_call.1} parent=1 // pred_check
      _
    $region79: #{tpu_custom_call.1} parent=1 // pred_check_branch
      %1499 = sbr.rel (0) target = $region81
    $region80: #{tpu_custom_call.1} parent=1 // pred_region
      %s1501 = ssub.s32 256, 256
      %1502 = vsyncadd [#allocation4], %s1501
      %s1503 = sshll.u32 [#allocation14], 4
      %s1504 = int_to_ptr.vmem [resolvable:$true] %s1503
      %1509 = dma.vmem_to_hbm [thread:$0]  %s1504, 256, %s12, [#allocation4], 128, 128, 8
    $region81: #{tpu_custom_call.1} parent=1 // pred_fallthru
      _
    // Predicated region
    $region82: #{tpu_custom_call.1} parent=1 // pred_check
      _
    $region83: #{tpu_custom_call.1} parent=1 // pred_check_branch
      %1511 = sbr.rel (0) target = $region85
    $region84: #{tpu_custom_call.1} parent=1 // pred_region
      %1512 = dma.done [#allocation4], 256
    $region85: #{tpu_custom_call.1} parent=1 // pred_fallthru
      _
    %1513 = vsyncpa [#allocation3], 1
    %1514 = vsyncpa [#allocation6], 1
    %1515 = vsyncpa [#allocation9], 1
    %1516 = vsyncpa [#allocation12], 1
    %1517 = vsyncpa [#allocation4], 1

</llo_original>
